<compile_context>
chip_gen: v6e
topology: v6e:2x2x1
jax: 0.10.0
libtpu: 0.0.40
codegen_flags: <defaults>
</compile_context>

<pallas_src>
import numpy as np
import jax
import jax.numpy as jnp
from jax.experimental import pallas as pl
from jax.experimental.pallas import tpu as pltpu


# ----------------------------------------------------------------------------
# Host-side: antialiased-bicubic resize matrix, replicating ATen's
# _compute_weights_aa / Pillow's resample kernel (cubic a = -0.5,
# support = 2*max(scale,1), renormalized rows).
# ----------------------------------------------------------------------------
def _cubic_filter(x, a=-0.5):
    x = abs(x)
    if x < 1.0:
        return ((a + 2.0) * x - (a + 3.0)) * x * x + 1.0
    if x < 2.0:
        return (((x - 5.0) * x + 8.0) * x - 4.0) * a
    return 0.0


def bicubic_aa_resize_matrix(in_size: int, out_size: int) -> np.ndarray:
    scale = in_size / out_size                      # < 1 for upsampling
    support = 2.0 * max(scale, 1.0)
    invscale = 1.0 / max(scale, 1.0)
    W = np.zeros((out_size, in_size), dtype=np.float64)
    for i in range(out_size):
        center = scale * (i + 0.5)
        xmin = max(int(center - support + 0.5), 0)   # C-style trunc, then clamp
        xmax = min(int(center + support + 0.5), in_size)
        ws = [_cubic_filter((j - center + 0.5) * invscale)
              for j in range(xmin, xmax)]
        total = sum(ws)
        if total != 0.0:
            for k, j in enumerate(range(xmin, xmax)):
                W[i, j] = ws[k] / total
    return W.astype(np.float32)


# ----------------------------------------------------------------------------
# Pallas kernel: per grid step, bt slices -> out[b] = W_h @ x[b] @ W_w^T,
# with both stages batch-fused as single big matmuls (batch on the M dim).
# ----------------------------------------------------------------------------
def _make_kernel(bt: int):
    def kernel(whT_ref, x_ref, wwt_ref, o_ref):
        H, H_out = whT_ref.shape          # W_h^T : (H, H_out)
        W, W_out = wwt_ref.shape          # W_w^T : (W, W_out)
        # Stage 1 (height resize), batch-fused on M:  (bt*W, H) @ (H, H_out).
        xt = jnp.swapaxes(x_ref[...], 1, 2).reshape(bt * W, H)
        t1 = jnp.dot(xt, whT_ref[...], preferred_element_type=jnp.float32)
        # Relayout the (small, 4x-input) intermediate: (bt, W, H_out) -> (bt*H_out, W).
        t2 = jnp.swapaxes(t1.reshape(bt, W, H_out), 1, 2).reshape(bt * H_out, W)
        # bf16 path: keep the big stage-2 matmul in bf16 (f32 accumulation).
        t2 = t2.astype(x_ref.dtype)
        # Stage 2 (width resize), batch-fused on M:  (bt*H_out, W) @ (W, W_out).
        out = jnp.dot(t2, wwt_ref[...], preferred_element_type=jnp.float32)
        # Leading-dim split only -> no relayout on the (largest) output.
        o_ref[...] = out.reshape(bt, H_out, W_out).astype(o_ref.dtype)
    return kernel


# ----------------------------------------------------------------------------
# VMEM accounting with real (sublane, lane) tile padding.
# ----------------------------------------------------------------------------
def _pad_up(n, m):
    return ((n + m - 1) // m) * m


def _vmem_footprint(bt, H, W, H_out, W_out, in_itemsize, weight_buffers=2):
    """Per-step VMEM estimate: last dim padded to 128 lanes, 2nd-to-last to
    8 (f32) / 16 (bf16) sublanes; x/out blocks double-buffered; all in-kernel
    temporaries counted as simultaneously live (conservative)."""
    sub_in = 8 if in_itemsize >= 4 else 16
    x_blk = bt * _pad_up(H, sub_in) * _pad_up(W, 128) * in_itemsize
    o_blk = bt * _pad_up(H_out, 8) * _pad_up(W_out, 128) * 4
    w_blk = (_pad_up(H, sub_in) * _pad_up(H_out, 128)
             + _pad_up(W, sub_in) * _pad_up(W_out, 128)) * in_itemsize
    xt = _pad_up(bt * W, sub_in) * _pad_up(H, 128) * in_itemsize
    t1 = _pad_up(bt * W, 8) * _pad_up(H_out, 128) * 4
    t2 = _pad_up(bt * H_out, 8) * _pad_up(W, 128) * 4
    t2c = 0 if in_itemsize >= 4 else _pad_up(bt * H_out, 16) * _pad_up(W, 128) * in_itemsize
    oacc = _pad_up(bt * H_out, 8) * _pad_up(W_out, 128) * 4
    return 2 * (x_blk + o_blk) + weight_buffers * w_blk + xt + t1 + t2 + t2c + oacc


def _vmem_capacity_bytes():
    try:
        cap = getattr(pltpu.get_tpu_info(), "vmem_capacity_bytes", None)
        if cap:
            return int(cap)
    except Exception:
        pass
    return 64 * 1024 * 1024    # conservative fallback (v7x per-TC VMEM)


# >= 2 grid steps per TensorCore on v7x megacore (and >= 3 on 1-TC v5e/v6e)
# so the x/out block DMAs double-buffer against compute on every core.
_MIN_GRID_STEPS = 4


def _choose_b_tile(B, H, W, H_out, W_out, in_itemsize, budget,
                   min_steps=_MIN_GRID_STEPS):
    """Steps-per-core first (pipelining + megacore), then the largest batch
    tile whose padded VMEM footprint fits the generation-aware budget."""
    bt = max(1, -(-B // min_steps))
    while bt > 1 and _vmem_footprint(bt, H, W, H_out, W_out, in_itemsize) > budget:
        bt = max(1, bt - max(1, bt // 8))
    return bt


# ----------------------------------------------------------------------------
# pallas_call builder + public wrapper.
# ----------------------------------------------------------------------------
def _build_resize_call(bt, steps, H, W, H_out, W_out, out_dtype, vmem_limit,
                       flops, bytes_accessed, single_buffer_weights):
    wkw = {"pipeline_mode": pl.Buffered(1)} if single_buffer_weights else {}
    return pl.pallas_call(
        _make_kernel(bt),
        out_shape=jax.ShapeDtypeStruct((steps * bt, H_out, W_out), out_dtype),
        grid_spec=pltpu.PrefetchScalarGridSpec(
            num_scalar_prefetch=0,
            grid=(steps,),
            in_specs=[
                pl.BlockSpec((H, H_out), lambda i: (0, 0), **wkw),   # W_h^T (resident)
                pl.BlockSpec((bt, H, W), lambda i: (i, 0, 0)),       # x tile
                pl.BlockSpec((W, W_out), lambda i: (0, 0), **wkw),   # W_w^T (resident)
            ],
            out_specs=pl.BlockSpec((bt, H_out, W_out), lambda i: (i, 0, 0)),
        ),
        compiler_params=pltpu.CompilerParams(
            dimension_semantics=("parallel",),
            vmem_limit_bytes=vmem_limit,
        ),
        cost_estimate=pl.CostEstimate(flops=int(flops), transcendentals=0,
                                      bytes_accessed=int(bytes_accessed)),
    )


def bicubic_sr(x: jax.Array, scale_factor: int = 4,
               use_bf16: bool = False) -> jax.Array:
    """x: (N, C, H, W) -> (N, C, H*sf, W*sf), PyTorch antialiased bicubic.

    use_bf16=True casts inputs/weights/intermediates to bf16 (f32 accumulation)
    for higher MXU throughput on v6e/v7x; it breaks bit-level parity with
    PyTorch, so it is off by default.
    """
    N, C, H, W = x.shape
    H_out, W_out = H * scale_factor, W * scale_factor
    out_dtype = x.dtype

    compute_dtype = jnp.bfloat16 if use_bf16 else jnp.float32
    in_itemsize = jnp.dtype(compute_dtype).itemsize

    whT = jnp.asarray(np.ascontiguousarray(bicubic_aa_resize_matrix(H, H_out).T),
                      dtype=compute_dtype)                 # (H, H_out)
    wwt = jnp.asarray(np.ascontiguousarray(bicubic_aa_resize_matrix(W, W_out).T),
                      dtype=compute_dtype)                 # (W, W_out)

    B = N * C
    vmem_cap = _vmem_capacity_bytes()
    budget = int(0.70 * vmem_cap)      # ~45 MiB on v7x, ~90 MiB on v5e/v6e
    bt = _choose_b_tile(B, H, W, H_out, W_out, in_itemsize, budget)
    steps = -(-B // bt)
    B_pad = steps * bt

    x_flat = x.reshape(B, H, W).astype(compute_dtype)
    if B_pad != B:
        # Zero-pad awkward batch sizes (prime / small-divisor B) so a large,
        # MXU-friendly tile is still usable; padded slices are dropped below.
        x_flat = jnp.pad(x_flat, ((0, B_pad - B), (0, 0), (0, 0)))

    flops = 2 * B_pad * (H * W * H_out + H_out * W * W_out)
    bytes_accessed = (B_pad * H * W * in_itemsize
                      + (H * H_out + W * W_out) * in_itemsize
                      + B_pad * H_out * W_out * jnp.dtype(out_dtype).itemsize)

    footprint = _vmem_footprint(bt, H, W, H_out, W_out, in_itemsize)
    vmem_limit = int(min(max(vmem_cap - (4 << 20), 32 << 20),
                         max(32 << 20, footprint + (8 << 20))))

    args = (bt, steps, H, W, H_out, W_out, out_dtype, vmem_limit, flops,
            bytes_accessed)
    try:
        out_flat = _build_resize_call(*args, single_buffer_weights=True)(
            whT, x_flat, wwt)
        out_flat = jax.block_until_ready(out_flat)
    except Exception:
        # pl.Buffered(1) on the constant-index weight specs is perf-only
        # (single-buffered weight residency); fall back to default pipelining
        # if the installed JAX rejects it.
        out_flat = _build_resize_call(*args, single_buffer_weights=False)(
            whT, x_flat, wwt)

    if B_pad != B:
        out_flat = out_flat[:B]
    return out_flat.reshape(N, C, H_out, W_out)


# ----------------------------------------------------------------------------
# Reference + self-test.
# ----------------------------------------------------------------------------
def _numpy_reference(x, scale_factor):
    N, C, H, W = x.shape
    wh = bicubic_aa_resize_matrix(H, H * scale_factor).astype(np.float64)
    ww = bicubic_aa_resize_matrix(W, W * scale_factor).astype(np.float64)
    xb = np.asarray(x).reshape(N * C, H, W).astype(np.float64)
    ref = np.einsum("oh,bhw,kw->bok", wh, xb, ww)
    return ref.reshape(N, C, H * scale_factor, W * scale_factor)


if __name__ == "__main__":
    key = jax.random.PRNGKey(0)

    # Main test: (2, 4, 16, 16) -> (2, 4, 64, 64); B=8 -> bt=2, 4 grid steps.
    x = jax.random.normal(key, (2, 4, 16, 16), dtype=jnp.float32)
    out = jax.block_until_ready(bicubic_sr(x, scale_factor=4))
    assert out.shape == (2, 4, 64, 64), out.shape
    assert out.dtype == jnp.float32
    assert bool(jnp.all(jnp.isfinite(out)))
    ref = _numpy_reference(x, 4)
    assert np.allclose(np.asarray(out), ref, atol=2e-3, rtol=2e-3)

    # Non-square input (W > H).
    x2 = jax.random.normal(jax.random.PRNGKey(0), (1, 2, 8, 16),
                           dtype=jnp.float32)
    out2 = jax.block_until_ready(bicubic_sr(x2, scale_factor=4))
    assert out2.shape == (1, 2, 32, 64), out2.shape
    ref2 = _numpy_reference(x2, 4)
    assert np.allclose(np.asarray(out2), ref2, atol=2e-3, rtol=2e-3)

    # Awkward batch (B = 7, prime): exercises the zero-padding path
    # (bt=2, 4 grid steps, one padded slice dropped at the end).
    x3 = jax.random.normal(jax.random.PRNGKey(1), (7, 1, 8, 8),
                           dtype=jnp.float32)
    out3 = jax.block_until_ready(bicubic_sr(x3, scale_factor=4))
    assert out3.shape == (7, 1, 32, 32), out3.shape
    ref3 = _numpy_reference(x3, 4)
    assert np.allclose(np.asarray(out3), ref3, atol=2e-3, rtol=2e-3)

    print("KERNEL_OK")
</pallas_src>

<mosaic_0001>
module attributes {stable_mosaic.version = 11 : i64} {
  func.func @kernel(%arg0: i32, %arg1: memref<16x64xf32, #tpu.memory_space<vmem>>, %arg2: memref<2x16x16xf32, #tpu.memory_space<vmem>>, %arg3: memref<16x64xf32, #tpu.memory_space<vmem>>, %arg4: memref<2x64x64xf32, #tpu.memory_space<vmem>>) attributes {dimension_semantics = [#tpu.dimension_semantics<parallel>], iteration_bounds = array<i64: 4>, scalar_prefetch = 0 : i64, scratch_operands = 0 : i64, tpu.core_type = #tpu.core_type<tc>, window_params = [{pipeline_mode = #tpu.pipeline_mode<synchronous>, transform_indices = @transform_0, window_bounds = array<i64: 16, 64>}, {transform_indices = @transform_1, window_bounds = array<i64: 2, 16, 16>}, {pipeline_mode = #tpu.pipeline_mode<synchronous>, transform_indices = @transform_2, window_bounds = array<i64: 16, 64>}, {transform_indices = @transform_3, window_bounds = array<i64: 2, 64, 64>}]} {
    %c0 = arith.constant 0 : index
    %c0_0 = arith.constant 0 : index
    %c0_1 = arith.constant 0 : index
    %0 = vector.load %arg2[%c0, %c0_0, %c0_1] : memref<2x16x16xf32, #tpu.memory_space<vmem>>, vector<2x16x16xf32>
    %1 = tpu.transpose %0, [0, 2, 1] : vector<2x16x16xf32> -> vector<2x16x16xf32>
    %2 = vector.shape_cast %1 : vector<2x16x16xf32> to vector<32x16xf32>
    %c0_2 = arith.constant 0 : index
    %c0_3 = arith.constant 0 : index
    %3 = vector.load %arg1[%c0_2, %c0_3] : memref<16x64xf32, #tpu.memory_space<vmem>>, vector<16x64xf32>
    %cst = arith.constant dense<0.000000e+00> : vector<32x64xf32>
    %4 = tpu.matmul %2, %3, %cst {dimension_numbers = #tpu.dot_dimension_numbers<[1], [0], [0], [1], [0, 0, 1, 1], [], []>} : vector<32x16xf32>, vector<16x64xf32>, vector<32x64xf32> -> vector<32x64xf32>
    %5 = vector.shape_cast %4 : vector<32x64xf32> to vector<2x16x64xf32>
    %6 = tpu.transpose %5, [0, 2, 1] : vector<2x16x64xf32> -> vector<2x64x16xf32>
    %7 = vector.shape_cast %6 : vector<2x64x16xf32> to vector<128x16xf32>
    %c0_4 = arith.constant 0 : index
    %c0_5 = arith.constant 0 : index
    %8 = vector.load %arg3[%c0_4, %c0_5] : memref<16x64xf32, #tpu.memory_space<vmem>>, vector<16x64xf32>
    %cst_6 = arith.constant dense<0.000000e+00> : vector<128x64xf32>
    %9 = tpu.matmul %7, %8, %cst_6 {dimension_numbers = #tpu.dot_dimension_numbers<[1], [0], [0], [1], [0, 0, 1, 1], [], []>} : vector<128x16xf32>, vector<16x64xf32>, vector<128x64xf32> -> vector<128x64xf32>
    %10 = vector.shape_cast %9 : vector<128x64xf32> to vector<2x64x64xf32>
    %c0_7 = arith.constant 0 : index
    %c0_8 = arith.constant 0 : index
    %c0_9 = arith.constant 0 : index
    %11 = vector.load %arg4[%c0_7, %c0_8, %c0_9] : memref<2x64x64xf32, #tpu.memory_space<vmem>>, vector<2x64x64xf32>
    tpu.vector_store %arg4[%c0_7, %c0_8, %c0_9], %10 {strides = array<i32>} : memref<2x64x64xf32, #tpu.memory_space<vmem>>, vector<2x64x64xf32>,
    return
  }
  func.func @transform_0(%arg0: i32) -> (i32, i32) {
    %c0_i32 = arith.constant 0 : i32
    %c0_i32_0 = arith.constant 0 : i32
    %c0_i32_1 = arith.constant 0 : i32
    return %c0_i32, %c0_i32_0 : i32, i32
  }
  func.func @transform_1(%arg0: i32) -> (i32, i32, i32) {
    %c0_i32 = arith.constant 0 : i32
    %c0_i32_0 = arith.constant 0 : i32
    %c0_i32_1 = arith.constant 0 : i32
    return %arg0, %c0_i32, %c0_i32_0 : i32, i32, i32
  }
  func.func @transform_2(%arg0: i32) -> (i32, i32) {
    %c0_i32 = arith.constant 0 : i32
    %c0_i32_0 = arith.constant 0 : i32
    %c0_i32_1 = arith.constant 0 : i32
    return %c0_i32, %c0_i32_0 : i32, i32
  }
  func.func @transform_3(%arg0: i32) -> (i32, i32, i32) {
    %c0_i32 = arith.constant 0 : i32
    %c0_i32_0 = arith.constant 0 : i32
    %c0_i32_1 = arith.constant 0 : i32
    return %arg0, %c0_i32, %c0_i32_0 : i32, i32, i32
  }
}

module attributes {stable_mosaic.version = 11 : i64} {
  func.func @kernel(%arg0: i32, %arg1: memref<16x64xf32, #tpu.memory_space<vmem>>, %arg2: memref<2x16x16xf32, #tpu.memory_space<vmem>>, %arg3: memref<16x64xf32, #tpu.memory_space<vmem>>, %arg4: memref<2x64x64xf32, #tpu.memory_space<vmem>>) attributes {dimension_semantics = [#tpu.dimension_semantics<parallel>], iteration_bounds = array<i64: 4>, scalar_prefetch = 0 : i64, scratch_operands = 0 : i64, tpu.core_type = #tpu.core_type<tc>, window_params = [{pipeline_mode = #tpu.pipeline_mode<synchronous>, transform_indices = @transform_0, window_bounds = array<i64: 16, 64>}, {transform_indices = @transform_1, window_bounds = array<i64: 2, 16, 16>}, {pipeline_mode = #tpu.pipeline_mode<synchronous>, transform_indices = @transform_2, window_bounds = array<i64: 16, 64>}, {transform_indices = @transform_3, window_bounds = array<i64: 2, 64, 64>}]} {
    %c0 = arith.constant 0 : index
    %c0_0 = arith.constant 0 : index
    %c0_1 = arith.constant 0 : index
    %0 = vector.load %arg2[%c0, %c0_0, %c0_1] : memref<2x16x16xf32, #tpu.memory_space<vmem>>, vector<2x16x16xf32>
    %1 = tpu.transpose %0, [0, 2, 1] : vector<2x16x16xf32> -> vector<2x16x16xf32>
    %2 = vector.shape_cast %1 : vector<2x16x16xf32> to vector<32x16xf32>
    %c0_2 = arith.constant 0 : index
    %c0_3 = arith.constant 0 : index
    %3 = vector.load %arg1[%c0_2, %c0_3] : memref<16x64xf32, #tpu.memory_space<vmem>>, vector<16x64xf32>
    %cst = arith.constant dense<0.000000e+00> : vector<32x64xf32>
    %4 = tpu.matmul %2, %3, %cst {dimension_numbers = #tpu.dot_dimension_numbers<[1], [0], [0], [1], [0, 0, 1, 1], [], []>} : vector<32x16xf32>, vector<16x64xf32>, vector<32x64xf32> -> vector<32x64xf32>
    %5 = vector.shape_cast %4 : vector<32x64xf32> to vector<2x16x64xf32>
    %6 = tpu.transpose %5, [0, 2, 1] : vector<2x16x64xf32> -> vector<2x64x16xf32>
    %7 = vector.shape_cast %6 : vector<2x64x16xf32> to vector<128x16xf32>
    %c0_4 = arith.constant 0 : index
    %c0_5 = arith.constant 0 : index
    %8 = vector.load %arg3[%c0_4, %c0_5] : memref<16x64xf32, #tpu.memory_space<vmem>>, vector<16x64xf32>
    %cst_6 = arith.constant dense<0.000000e+00> : vector<128x64xf32>
    %9 = tpu.matmul %7, %8, %cst_6 {dimension_numbers = #tpu.dot_dimension_numbers<[1], [0], [0], [1], [0, 0, 1, 1], [], []>} : vector<128x16xf32>, vector<16x64xf32>, vector<128x64xf32> -> vector<128x64xf32>
    %10 = vector.shape_cast %9 : vector<128x64xf32> to vector<2x64x64xf32>
    %c0_7 = arith.constant 0 : index
    %c0_8 = arith.constant 0 : index
    %c0_9 = arith.constant 0 : index
    %11 = vector.load %arg4[%c0_7, %c0_8, %c0_9] : memref<2x64x64xf32, #tpu.memory_space<vmem>>, vector<2x64x64xf32>
    tpu.vector_store %arg4[%c0_7, %c0_8, %c0_9], %10 {strides = array<i32>} : memref<2x64x64xf32, #tpu.memory_space<vmem>>, vector<2x64x64xf32>,
    return
  }
  func.func @transform_0(%arg0: i32) -> (i32, i32) {
    %c0_i32 = arith.constant 0 : i32
    %c0_i32_0 = arith.constant 0 : i32
    %c0_i32_1 = arith.constant 0 : i32
    return %c0_i32, %c0_i32_0 : i32, i32
  }
  func.func @transform_1(%arg0: i32) -> (i32, i32, i32) {
    %c0_i32 = arith.constant 0 : i32
    %c0_i32_0 = arith.constant 0 : i32
    %c0_i32_1 = arith.constant 0 : i32
    return %arg0, %c0_i32, %c0_i32_0 : i32, i32, i32
  }
  func.func @transform_2(%arg0: i32) -> (i32, i32) {
    %c0_i32 = arith.constant 0 : i32
    %c0_i32_0 = arith.constant 0 : i32
    %c0_i32_1 = arith.constant 0 : i32
    return %c0_i32, %c0_i32_0 : i32, i32
  }
  func.func @transform_3(%arg0: i32) -> (i32, i32, i32) {
    %c0_i32 = arith.constant 0 : i32
    %c0_i32_0 = arith.constant 0 : i32
    %c0_i32_1 = arith.constant 0 : i32
    return %arg0, %c0_i32, %c0_i32_0 : i32, i32, i32
  }
}

</mosaic_0001>

<llo_original>
// kernel: tpu_custom_call.1
$region0: #{tpu_custom_call.1}
  #allocation0 [shape = 'u32[]', space=smem, size = 0x4, offset = 0x4, fixed_abs, tag = 'smem constant byte address 0x4 - core index']
  #allocation1 [shape = 'u32[144,128]{1,0:T(1,128)}', space=vmem, size = 0x12000, scoped, tag = 'internal scratch']
  %s0 = inlined_call_operand.hbm [shape: f32[16,64], index: 0, kind: input, shape index: {}]
  %s1 = inlined_call_operand.hbm [shape: f32[8,16,16], index: 1, kind: input, shape index: {}]
  %s2 = inlined_call_operand.hbm [shape: f32[16,64], index: 2, kind: input, shape index: {}]
  %s3 = inlined_call_operand.hbm [shape: f32[8,64,64], index: 3, kind: output, shape index: {}]
  %s4 = sld [smem:[#allocation0]]
  $region57: #{tpu_custom_call.1} parent=0
    _
  %s6 = ssub.s32 1, %s4
  %s7 = scalar_select 0, %s6, %s4
  $region1: #{tpu_custom_call.1} parent=0
    #allocation2 [shape = 'u8[8192]{0}', space=vmem, size = 0x2000, scoped, tag = 'input window, operand 0, single buffered']
    #allocation3 [shape = 's32[2]{0}', space=sflag, size = 0x8, scoped, tag = 'scoped memory for tpu_custom_call.1']
    #allocation4 [shape = 's32[2]{0}', space=sflag, size = 0x8, scoped, tag = 'scoped memory for tpu_custom_call.1']
    #allocation5 [shape = 'u8[32768]{0}', space=vmem, size = 0x8000, scoped, tag = 'input window, operand 1']
    #allocation6 [shape = 's32[2]{0}', space=sflag, size = 0x8, scoped, tag = 'scoped memory for tpu_custom_call.1']
    #allocation7 [shape = 'u8[8192]{0}', space=vmem, size = 0x2000, scoped, tag = 'input window, operand 2, single buffered']
    #allocation8 [shape = 'u8[131072]{0}', space=vmem, size = 0x20000, scoped, tag = 'output window, operand 0']
    %8 = vsyncpa [#allocation3], 0
    %9 = vsyncpa [#allocation6], 0
    %s10 = scalar_lea.sflag [#allocation6], 1
    %11 = vsyncpa %s10, 0
    %12 = vsyncpa [#allocation4], 0
    %s13 = scalar_lea.sflag [#allocation4], 1
    %14 = vsyncpa %s13, 0
    loop: start=0, step=1, limit=6
    $region2: #{tpu_custom_call.1} parent=1 // loop_pre_header
      _
    $region3: #{tpu_custom_call.1} parent=1 // loop_header
      %s16 = sphi 0, %s20
      %p17 = scmp.ge.s32.totalorder %s16, 6
      %s24 = sphi 0, %s24
      %s26 = sphi 0, %s24
      %s27 = sphi 0, %s26
      %s41 = sphi 0, %s27
      %s47 = sphi 0, %s49
      %s50 = sphi 0, %s47
      %s51 = sphi 0, %s50
      %s67 = sphi 0, %s51
      %s71 = sphi 0, %s71
      %s73 = sphi 0, %s71
      %s74 = sphi 0, %s73
      %s88 = sphi 0, %s74
      %s94 = sphi 0, %s96
      %s97 = sphi 0, %s94
      %s98 = sphi 0, %s97
      %s114 = sphi 0, %s98
    $region4: #{tpu_custom_call.1} parent=1 // loop_header_branch
      %19 = sbr.rel (%p17) target = $region8
    $region5: #{tpu_custom_call.1} parent=1 // loop_body
      %s21 = ssub.s32 %s16, 1
      %s22 = ssub.s32 %s16, 2
      %s23 = sadd.s32 %s16, 1
      %s25 = sadd.s32 %s24, 1
      %p28 = scmp.eq.s32.totalorder %s16, 3
      %p29 = scmp.ne.s32.totalorder %s24, %s26
      %p30 = scmp.eq.s32.totalorder %s16, 0
      %p31 = por %p29, %p30
      %p32 = scmp.ne.s32.totalorder %s24, %s26
      %p33 = scmp.eq.s32.totalorder %s21, 3
      %p34 = por %p32, %p33
      %p35 = scmp.ne.s32.totalorder %s26, %s27
      %p36 = scmp.eq.s32.totalorder %s21, 0
      %p37 = por %p35, %p36
      %p38 = scmp.ne.s32.totalorder %s26, %s27
      %p39 = scmp.eq.s32.totalorder %s22, 3
      %p40 = por %p38, %p39
      %p42 = scmp.ne.s32.totalorder %s27, %s41
      %p43 = scmp.eq.s32.totalorder %s22, 0
      %p44 = por %p42, %p43
      %s45 = ssub.s32 %s16, %s23
      %p46 = scmp.eq.s32.totalorder %s45, 0
      %s48 = sadd.s32 %s47, 1
      %s49 = scalar_select %p46, %s47, %s48
      %p52 = pneg %p46
      %p53 = scmp.eq.s32.totalorder %s16, 3
      %p54 = por %p52, %p53
      %p55 = scmp.ne.s32.totalorder %s47, %s50
      %p56 = scmp.eq.s32.totalorder %s16, 0
      %p57 = por %p55, %p56
      %p58 = scmp.ne.s32.totalorder %s47, %s50
      %p59 = scmp.eq.s32.totalorder %s21, 3
      %p60 = por %p58, %p59
      %p61 = scmp.ne.s32.totalorder %s50, %s51
      %p62 = scmp.eq.s32.totalorder %s21, 0
      %p63 = por %p61, %p62
      %p64 = scmp.ne.s32.totalorder %s50, %s51
      %p65 = scmp.eq.s32.totalorder %s22, 3
      %p66 = por %p64, %p65
      %p68 = scmp.ne.s32.totalorder %s51, %s67
      %p69 = scmp.eq.s32.totalorder %s22, 0
      %p70 = por %p68, %p69
      %s72 = sadd.s32 %s71, 1
      %p75 = scmp.eq.s32.totalorder %s16, 3
      %p76 = scmp.ne.s32.totalorder %s71, %s73
      %p77 = scmp.eq.s32.totalorder %s16, 0
      %p78 = por %p76, %p77
      %p79 = scmp.ne.s32.totalorder %s71, %s73
      %p80 = scmp.eq.s32.totalorder %s21, 3
      %p81 = por %p79, %p80
      %p82 = scmp.ne.s32.totalorder %s73, %s74
      %p83 = scmp.eq.s32.totalorder %s21, 0
      %p84 = por %p82, %p83
      %p85 = scmp.ne.s32.totalorder %s73, %s74
      %p86 = scmp.eq.s32.totalorder %s22, 3
      %p87 = por %p85, %p86
      %p89 = scmp.ne.s32.totalorder %s74, %s88
      %p90 = scmp.eq.s32.totalorder %s22, 0
      %p91 = por %p89, %p90
      %s92 = ssub.s32 %s16, %s23
      %p93 = scmp.eq.s32.totalorder %s92, 0
      %s95 = sadd.s32 %s94, 1
      %s96 = scalar_select %p93, %s94, %s95
      %p99 = pneg %p93
      %p100 = scmp.eq.s32.totalorder %s16, 3
      %p101 = por %p99, %p100
      %p102 = scmp.ne.s32.totalorder %s94, %s97
      %p103 = scmp.eq.s32.totalorder %s16, 0
      %p104 = por %p102, %p103
      %p105 = scmp.ne.s32.totalorder %s94, %s97
      %p106 = scmp.eq.s32.totalorder %s21, 3
      %p107 = por %p105, %p106
      %p108 = scmp.ne.s32.totalorder %s97, %s98
      %p109 = scmp.eq.s32.totalorder %s21, 0
      %p110 = por %p108, %p109
      %p111 = scmp.ne.s32.totalorder %s97, %s98
      %p112 = scmp.eq.s32.totalorder %s22, 3
      %p113 = por %p111, %p112
      %p115 = scmp.ne.s32.totalorder %s98, %s114
      %p116 = scmp.eq.s32.totalorder %s22, 0
      %p117 = por %p115, %p116
      %p118 = scmp.le.s32.totalorder 1, %s16
      %p119 = scmp.lt.s32.totalorder %s16, 5
      %p120 = pnand %p118, %p119
      %p121 = pneg %p120
      // Predicated region
      $region9: #{tpu_custom_call.1} parent=5 // pred_check
        _
      $region10: #{tpu_custom_call.1} parent=5 // pred_check_branch
        %123 = sbr.rel (%p120) target = $region12
      $region11: #{tpu_custom_call.1} parent=5 // pred_region
        %s124 = ssub.s32 %s16, 1
        // Predicated region
        $region13: #{tpu_custom_call.1} parent=11 // pred_check
          %p125 = pneg %p37
        $region14: #{tpu_custom_call.1} parent=11 // pred_check_branch
          %127 = sbr.rel (%p125) target = $region16
        $region15: #{tpu_custom_call.1} parent=11 // pred_region
          %s129 = ssub.s32 256, 256
          %130 = vsyncadd [#allocation3], %s129
          %s131 = sshll.u32 [#allocation2], 4
          %s132 = int_to_ptr.vmem [resolvable:$true] %s131
          %137 = dma.hbm_to_vmem [thread:$0]  %s0, 256, %s132, [#allocation3], 128, 128, 8
        $region16: #{tpu_custom_call.1} parent=11 // pred_fallthru
          _
        // Predicated region
        $region17: #{tpu_custom_call.1} parent=11 // pred_check
          %p138 = pneg %p84
        $region18: #{tpu_custom_call.1} parent=11 // pred_check_branch
          %140 = sbr.rel (%p138) target = $region20
        $region19: #{tpu_custom_call.1} parent=11 // pred_region
          %s142 = ssub.s32 256, 256
          %143 = vsyncadd [#allocation6], %s142
          %s144 = sshll.u32 [#allocation7], 4
          %s145 = int_to_ptr.vmem [resolvable:$true] %s144
          %150 = dma.hbm_to_vmem [thread:$0]  %s2, 256, %s145, [#allocation6], 128, 128, 8
        $region20: #{tpu_custom_call.1} parent=11 // pred_fallthru
          _
      $region12: #{tpu_custom_call.1} parent=5 // pred_fallthru
        _
      %p151 = scmp.lt.s32.totalorder %s16, 4
      // Predicated region
      $region21: #{tpu_custom_call.1} parent=5 // pred_check
        %p152 = pneg %p151
      $region22: #{tpu_custom_call.1} parent=5 // pred_check_branch
        %154 = sbr.rel (%p152) target = $region24
      $region23: #{tpu_custom_call.1} parent=5 // pred_region
        // Predicated region
        $region25: #{tpu_custom_call.1} parent=23 // pred_check
          %p155 = pneg %p57
        $region26: #{tpu_custom_call.1} parent=23 // pred_check_branch
          %157 = sbr.rel (%p155) target = $region28
        $region27: #{tpu_custom_call.1} parent=23 // pred_region
          %s158 = sand.u32 %s16, 1
          %s159 = scalar_lea.sflag [#allocation6], %s158
          %s160 = sand.u32 %s47, 1
          %s161 = smul.addr %s160, 32
          %s162 = scalar_lea.vmem [#allocation5], %s161
          %s163 = smul.u32 2, %s16
          %s165 = ssub.s32 512, 512
          %166 = vsyncadd %s159, %s165
          %s167 = smul.addr %s163, 2
          %s168 = smul.addr %s167, 128
          %s169 = scalar_lea.hbm %s1, %s168
          %s170 = sshll.u32 %s162, 4
          %s171 = int_to_ptr.vmem [resolvable:$true] %s170
          %176 = dma.hbm_to_vmem [thread:$0]  %s169, 512, %s171, %s159, 128, 128, 8
        $region28: #{tpu_custom_call.1} parent=23 // pred_fallthru
          _
      $region24: #{tpu_custom_call.1} parent=5 // pred_fallthru
        _
      %p177 = scmp.le.s32.totalorder 1, %s16
      %p178 = scmp.lt.s32.totalorder %s16, 5
      %p179 = pnand %p177, %p178
      %p180 = pneg %p179
      // Predicated region
      $region29: #{tpu_custom_call.1} parent=5 // pred_check
        _
      $region30: #{tpu_custom_call.1} parent=5 // pred_check_branch
        %182 = sbr.rel (%p179) target = $region32
      $region31: #{tpu_custom_call.1} parent=5 // pred_region
        %s183 = ssub.s32 %s16, 1
        // Predicated region
        $region33: #{tpu_custom_call.1} parent=31 // pred_check
          %p184 = pneg %p37
        $region34: #{tpu_custom_call.1} parent=31 // pred_check_branch
          %186 = sbr.rel (%p184) target = $region36
        $region35: #{tpu_custom_call.1} parent=31 // pred_region
          %187 = dma.done [#allocation3], 256
        $region36: #{tpu_custom_call.1} parent=31 // pred_fallthru
          _
        %s188 = sand.u32 %s21, 1
        %s189 = scalar_lea.sflag [#allocation6], %s188
        %s190 = sand.u32 %s50, 1
        %s191 = smul.addr %s190, 32
        %s192 = scalar_lea.vmem [#allocation5], %s191
        // Predicated region
        $region37: #{tpu_custom_call.1} parent=31 // pred_check
          %p193 = pneg %p63
        $region38: #{tpu_custom_call.1} parent=31 // pred_check_branch
          %195 = sbr.rel (%p193) target = $region40
        $region39: #{tpu_custom_call.1} parent=31 // pred_region
          %196 = dma.done %s189, 512
        $region40: #{tpu_custom_call.1} parent=31 // pred_fallthru
          _
        // Predicated region
        $region41: #{tpu_custom_call.1} parent=31 // pred_check
          %p197 = pneg %p84
        $region42: #{tpu_custom_call.1} parent=31 // pred_check_branch
          %199 = sbr.rel (%p197) target = $region44
        $region43: #{tpu_custom_call.1} parent=31 // pred_region
          %200 = dma.done [#allocation6], 256
        $region44: #{tpu_custom_call.1} parent=31 // pred_fallthru
          _
        %p201 = pneg %p37
        %p202 = pneg %p34
        %s203 = sand.u32 %s21, 1
        %s204 = scalar_lea.sflag [#allocation6], %s203
        %s205 = sand.u32 %s50, 1
        %s206 = smul.addr %s205, 32
        %s207 = scalar_lea.vmem [#allocation5], %s206
        %p208 = pneg %p63
        %p209 = pneg %p60
        %p210 = pneg %p84
        %p211 = pneg %p81
        %p212 = pneg %p110
        %p213 = pneg %p107
        %s214 = sand.u32 %s97, 1
        %s215 = scalar_lea.sflag [#allocation4], %s214
        %s216 = sand.u32 %s97, 1
        %s217 = smul.addr %s216, 128
        %s218 = scalar_lea.vmem [#allocation8], %s217
        %s219 = smul.u32 2, %s21
        %s220 = smul.u32 2, %s21
        %v221 = vld [vmem:[%s192] sm:$0xff]
        %v222 = vld [vmem:[%s192 + $0x8] sm:$0xff]
        %v223 = vld [vmem:[%s192 + $0x10] sm:$0xff]
        %v224 = vld [vmem:[%s192 + $0x18] sm:$0xff]
        %225 = vxpose.xlu0.b32.start [1/16] %v221, 128
        %226 = vxpose.xlu0.b32.cont [2/16] %v222, 128
        %227 = vxpose.xlu0.b32.cont [3/16] 0.0, 128
        %228 = vxpose.xlu0.b32.cont [4/16] 0.0, 128
        %229 = vxpose.xlu0.b32.cont [5/16] 0.0, 128
        %230 = vxpose.xlu0.b32.cont [6/16] 0.0, 128
        %231 = vxpose.xlu0.b32.cont [7/16] 0.0, 128
        %232 = vxpose.xlu0.b32.cont [8/16] 0.0, 128
        %233 = vxpose.xlu0.b32.cont [9/16] 0.0, 128
        %234 = vxpose.xlu0.b32.cont [10/16] 0.0, 128
        %235 = vxpose.xlu0.b32.cont [11/16] 0.0, 128
        %236 = vxpose.xlu0.b32.cont [12/16] 0.0, 128
        %237 = vxpose.xlu0.b32.cont [13/16] 0.0, 128
        %238 = vxpose.xlu0.b32.cont [14/16] 0.0, 128
        %239 = vxpose.xlu0.b32.cont [15/16] 0.0, 128
        %240 = vxpose.xlu0.b32.end [16/16] 0.0, 128
        %v241 = vpop.trf.xlu0
        %v242 = vpop.trf.xlu0
        %v243 = vpop.trf.xlu0
        %v244 = vpop.trf.xlu0
        %v245 = vpop.trf.xlu0
        %v246 = vpop.trf.xlu0
        %v247 = vpop.trf.xlu0
        %v248 = vpop.trf.xlu0
        %v249 = vpop.trf.xlu0
        %v250 = vpop.trf.xlu0
        %v251 = vpop.trf.xlu0
        %v252 = vpop.trf.xlu0
        %v253 = vpop.trf.xlu0
        %v254 = vpop.trf.xlu0
        %v255 = vpop.trf.xlu0
        %v256 = vpop.trf.xlu0
        %257 = vxpose.xlu0.b32.start [1/16] %v223, 128
        %258 = vxpose.xlu0.b32.cont [2/16] %v224, 128
        %259 = vxpose.xlu0.b32.cont [3/16] 0.0, 128
        %260 = vxpose.xlu0.b32.cont [4/16] 0.0, 128
        %261 = vxpose.xlu0.b32.cont [5/16] 0.0, 128
        %262 = vxpose.xlu0.b32.cont [6/16] 0.0, 128
        %263 = vxpose.xlu0.b32.cont [7/16] 0.0, 128
        %264 = vxpose.xlu0.b32.cont [8/16] 0.0, 128
        %265 = vxpose.xlu0.b32.cont [9/16] 0.0, 128
        %266 = vxpose.xlu0.b32.cont [10/16] 0.0, 128
        %267 = vxpose.xlu0.b32.cont [11/16] 0.0, 128
        %268 = vxpose.xlu0.b32.cont [12/16] 0.0, 128
        %269 = vxpose.xlu0.b32.cont [13/16] 0.0, 128
        %270 = vxpose.xlu0.b32.cont [14/16] 0.0, 128
        %271 = vxpose.xlu0.b32.cont [15/16] 0.0, 128
        %272 = vxpose.xlu0.b32.end [16/16] 0.0, 128
        %v273 = vpop.trf.xlu0
        %v274 = vpop.trf.xlu0
        %v275 = vpop.trf.xlu0
        %v276 = vpop.trf.xlu0
        %v277 = vpop.trf.xlu0
        %v278 = vpop.trf.xlu0
        %v279 = vpop.trf.xlu0
        %v280 = vpop.trf.xlu0
        %v281 = vpop.trf.xlu0
        %v282 = vpop.trf.xlu0
        %v283 = vpop.trf.xlu0
        %v284 = vpop.trf.xlu0
        %v285 = vpop.trf.xlu0
        %v286 = vpop.trf.xlu0
        %v287 = vpop.trf.xlu0
        %v288 = vpop.trf.xlu0
        %v289 = vld [vmem:[#allocation2] sm:$0xff]
        %v290 = vld [vmem:[#allocation2 + $0x8] sm:$0xff]
        %vm291 = vcmask 130048
        %v293 = vsel %vm291, %v241, 0
        %v296 = vsel %vm291, %v242, 0
        %v299 = vsel %vm291, %v273, 0
        %v302 = vsel %vm291, %v274, 0
        %304 = vmatprep.subr.mxu0 0.0
        %305 = vmatpush1.msra.mxu0 0.0
        %306 = vmatprep.subr.mxu0 0.0
        %307 = vmatpush1.msra.mxu0 0.0
        %308 = vmatprep.subr.mxu0 0.0
        %309 = vmatpush1.msra.mxu0 0.0
        %310 = vmatprep.subr.mxu0 0.0
        %311 = vmatpush1.msra.mxu0 0.0
        %312 = vmatprep.subr.mxu0 0.0
        %313 = vmatpush1.msra.mxu0 0.0
        %314 = vmatprep.subr.mxu0 0.0
        %315 = vmatpush1.msra.mxu0 0.0
        %316 = vmatprep.subr.mxu0 0.0
        %317 = vmatpush1.msra.mxu0 0.0
        %318 = vmatprep.subr.mxu0 0.0
        %319 = vmatpush1.msra.mxu0 0.0
        %320 = vmatprep.subr.mxu0 0.0
        %321 = vmatpush1.msra.mxu0 0.0
        %322 = vmatprep.subr.mxu0 0.0
        %323 = vmatpush1.msra.mxu0 0.0
        %324 = vmatprep.subr.mxu0 0.0
        %325 = vmatpush1.msra.mxu0 0.0
        %326 = vmatprep.subr.mxu0 0.0
        %327 = vmatpush1.msra.mxu0 0.0
        %328 = vmatprep.subr.mxu0 0.0
        %329 = vmatpush1.msra.mxu0 0.0
        %330 = vmatprep.subr.mxu0 0.0
        %331 = vmatpush1.msra.mxu0 0.0
        %332 = vmatprep.subr.mxu0 0.0
        %333 = vmatpush1.msra.mxu0 %v290
        %334 = vmatprep.subr.mxu0 0.0
        %335 = vmatpush1.msra.mxu0 %v289
        %336 = vmatprep.subr.mxu0 0.0
        %337 = vmatpush2.msra.mxu0 0.0
        %338 = vmatprep.subr.mxu0 0.0
        %339 = vmatpush2.msra.mxu0 0.0
        %340 = vmatprep.subr.mxu0 0.0
        %341 = vmatpush2.msra.mxu0 0.0
        %342 = vmatprep.subr.mxu0 0.0
        %343 = vmatpush2.msra.mxu0 0.0
        %344 = vmatprep.subr.mxu0 0.0
        %345 = vmatpush2.msra.mxu0 0.0
        %346 = vmatprep.subr.mxu0 0.0
        %347 = vmatpush2.msra.mxu0 0.0
        %348 = vmatprep.subr.mxu0 0.0
        %349 = vmatpush2.msra.mxu0 0.0
        %350 = vmatprep.subr.mxu0 0.0
        %351 = vmatpush2.msra.mxu0 0.0
        %352 = vmatprep.subr.mxu0 0.0
        %353 = vmatpush2.msra.mxu0 0.0
        %354 = vmatprep.subr.mxu0 0.0
        %355 = vmatpush2.msra.mxu0 0.0
        %356 = vmatprep.subr.mxu0 0.0
        %357 = vmatpush2.msra.mxu0 0.0
        %358 = vmatprep.subr.mxu0 0.0
        %359 = vmatpush2.msra.mxu0 0.0
        %360 = vmatprep.subr.mxu0 0.0
        %361 = vmatpush2.msra.mxu0 0.0
        %362 = vmatprep.subr.mxu0 0.0
        %363 = vmatpush2.msra.mxu0 0.0
        %364 = vmatprep.subr.mxu0 0.0
        %365 = vmatpush2.msra.mxu0 0.0
        %366 = vmatprep.subr.mxu0 0.0
        %367 = vmatpush2.msra.mxu0 0.0
        %368 = vmatprep.mubr.f32.mxu0 0.0
        %369 = vmatmul.mubr.f32.gmra.mxu0 %v293
        %v370 = vpop.f32.mrf.mxu0
        %v371 = vadd.f32 0.0, %v370
        %v372 = vpop.f32.mrf.mxu0
        %373 = vmatprep.mubr.f32.mxu0 0.0
        %374 = vmatmul.mubr.f32.gmra.mxu0 %v296
        %v375 = vpop.f32.mrf.mxu0
        %v376 = vadd.f32 0.0, %v375
        %v377 = vpop.f32.mrf.mxu0
        %378 = vmatprep.mubr.f32.mxu0 0.0
        %379 = vmatmul.mubr.f32.gmra.mxu0 %v299
        %v380 = vpop.f32.mrf.mxu0
        %v381 = vadd.f32 0.0, %v380
        %v382 = vpop.f32.mrf.mxu0
        %383 = vmatprep.mubr.f32.mxu0 0.0
        %384 = vmatmul.mubr.f32.gmra.mxu0 %v302
        %v385 = vpop.f32.mrf.mxu0
        %v386 = vadd.f32 0.0, %v385
        %v387 = vpop.f32.mrf.mxu0
        %388 = vdwg.mxu0
        %389 = vxpose.xlu0.b32.start [1/16] %v371, 128
        %390 = vxpose.xlu0.b32.cont [2/16] %v376, 128
        %391 = vxpose.xlu0.b32.cont [3/16] 0.0, 128
        %392 = vxpose.xlu0.b32.cont [4/16] 0.0, 128
        %393 = vxpose.xlu0.b32.cont [5/16] 0.0, 128
        %394 = vxpose.xlu0.b32.cont [6/16] 0.0, 128
        %395 = vxpose.xlu0.b32.cont [7/16] 0.0, 128
        %396 = vxpose.xlu0.b32.cont [8/16] 0.0, 128
        %397 = vxpose.xlu0.b32.cont [9/16] 0.0, 128
        %398 = vxpose.xlu0.b32.cont [10/16] 0.0, 128
        %399 = vxpose.xlu0.b32.cont [11/16] 0.0, 128
        %400 = vxpose.xlu0.b32.cont [12/16] 0.0, 128
        %401 = vxpose.xlu0.b32.cont [13/16] 0.0, 128
        %402 = vxpose.xlu0.b32.cont [14/16] 0.0, 128
        %403 = vxpose.xlu0.b32.cont [15/16] 0.0, 128
        %404 = vxpose.xlu0.b32.end [16/16] 0.0, 128
        %v405 = vpop.trf.xlu0
        %v406 = vpop.trf.xlu0
        %v407 = vpop.trf.xlu0
        %v408 = vpop.trf.xlu0
        %v409 = vpop.trf.xlu0
        %v410 = vpop.trf.xlu0
        %v411 = vpop.trf.xlu0
        %v412 = vpop.trf.xlu0
        %v413 = vpop.trf.xlu0
        %v414 = vpop.trf.xlu0
        %v415 = vpop.trf.xlu0
        %v416 = vpop.trf.xlu0
        %v417 = vpop.trf.xlu0
        %v418 = vpop.trf.xlu0
        %v419 = vpop.trf.xlu0
        %v420 = vpop.trf.xlu0
        %421 = vxpose.xlu0.b32.start [1/16] %v381, 128
        %422 = vxpose.xlu0.b32.cont [2/16] %v386, 128
        %423 = vxpose.xlu0.b32.cont [3/16] 0.0, 128
        %424 = vxpose.xlu0.b32.cont [4/16] 0.0, 128
        %425 = vxpose.xlu0.b32.cont [5/16] 0.0, 128
        %426 = vxpose.xlu0.b32.cont [6/16] 0.0, 128
        %427 = vxpose.xlu0.b32.cont [7/16] 0.0, 128
        %428 = vxpose.xlu0.b32.cont [8/16] 0.0, 128
        %429 = vxpose.xlu0.b32.cont [9/16] 0.0, 128
        %430 = vxpose.xlu0.b32.cont [10/16] 0.0, 128
        %431 = vxpose.xlu0.b32.cont [11/16] 0.0, 128
        %432 = vxpose.xlu0.b32.cont [12/16] 0.0, 128
        %433 = vxpose.xlu0.b32.cont [13/16] 0.0, 128
        %434 = vxpose.xlu0.b32.cont [14/16] 0.0, 128
        %435 = vxpose.xlu0.b32.cont [15/16] 0.0, 128
        %436 = vxpose.xlu0.b32.end [16/16] 0.0, 128
        %v437 = vpop.trf.xlu0
        %v438 = vpop.trf.xlu0
        %v439 = vpop.trf.xlu0
        %v440 = vpop.trf.xlu0
        %v441 = vpop.trf.xlu0
        %v442 = vpop.trf.xlu0
        %v443 = vpop.trf.xlu0
        %v444 = vpop.trf.xlu0
        %v445 = vpop.trf.xlu0
        %v446 = vpop.trf.xlu0
        %v447 = vpop.trf.xlu0
        %v448 = vpop.trf.xlu0
        %v449 = vpop.trf.xlu0
        %v450 = vpop.trf.xlu0
        %v451 = vpop.trf.xlu0
        %v452 = vpop.trf.xlu0
        %v453 = vld [vmem:[#allocation7] sm:$0xff]
        %v454 = vld [vmem:[#allocation7 + $0x8] sm:$0xff]
        %v456 = vsel %vm291, %v405, 0
        %v459 = vsel %vm291, %v406, 0
        %v462 = vsel %vm291, %v407, 0
        %v465 = vsel %vm291, %v408, 0
        %v468 = vsel %vm291, %v409, 0
        %v471 = vsel %vm291, %v410, 0
        %v474 = vsel %vm291, %v411, 0
        %v477 = vsel %vm291, %v412, 0
        %v480 = vsel %vm291, %v437, 0
        %v483 = vsel %vm291, %v438, 0
        %v486 = vsel %vm291, %v439, 0
        %v489 = vsel %vm291, %v440, 0
        %v492 = vsel %vm291, %v441, 0
        %v495 = vsel %vm291, %v442, 0
        %v498 = vsel %vm291, %v443, 0
        %v501 = vsel %vm291, %v444, 0
        %503 = vmatprep.subr.mxu0 0.0
        %504 = vmatpush1.msra.mxu0 0.0
        %505 = vmatprep.subr.mxu0 0.0
        %506 = vmatpush1.msra.mxu0 0.0
        %507 = vmatprep.subr.mxu0 0.0
        %508 = vmatpush1.msra.mxu0 0.0
        %509 = vmatprep.subr.mxu0 0.0
        %510 = vmatpush1.msra.mxu0 0.0
        %511 = vmatprep.subr.mxu0 0.0
        %512 = vmatpush1.msra.mxu0 0.0
        %513 = vmatprep.subr.mxu0 0.0
        %514 = vmatpush1.msra.mxu0 0.0
        %515 = vmatprep.subr.mxu0 0.0
        %516 = vmatpush1.msra.mxu0 0.0
        %517 = vmatprep.subr.mxu0 0.0
        %518 = vmatpush1.msra.mxu0 0.0
        %519 = vmatprep.subr.mxu0 0.0
        %520 = vmatpush1.msra.mxu0 0.0
        %521 = vmatprep.subr.mxu0 0.0
        %522 = vmatpush1.msra.mxu0 0.0
        %523 = vmatprep.subr.mxu0 0.0
        %524 = vmatpush1.msra.mxu0 0.0
        %525 = vmatprep.subr.mxu0 0.0
        %526 = vmatpush1.msra.mxu0 0.0
        %527 = vmatprep.subr.mxu0 0.0
        %528 = vmatpush1.msra.mxu0 0.0
        %529 = vmatprep.subr.mxu0 0.0
        %530 = vmatpush1.msra.mxu0 0.0
        %531 = vmatprep.subr.mxu0 0.0
        %532 = vmatpush1.msra.mxu0 %v454
        %533 = vmatprep.subr.mxu0 0.0
        %534 = vmatpush1.msra.mxu0 %v453
        %535 = vmatprep.subr.mxu0 0.0
        %536 = vmatpush2.msra.mxu0 0.0
        %537 = vmatprep.subr.mxu0 0.0
        %538 = vmatpush2.msra.mxu0 0.0
        %539 = vmatprep.subr.mxu0 0.0
        %540 = vmatpush2.msra.mxu0 0.0
        %541 = vmatprep.subr.mxu0 0.0
        %542 = vmatpush2.msra.mxu0 0.0
        %543 = vmatprep.subr.mxu0 0.0
        %544 = vmatpush2.msra.mxu0 0.0
        %545 = vmatprep.subr.mxu0 0.0
        %546 = vmatpush2.msra.mxu0 0.0
        %547 = vmatprep.subr.mxu0 0.0
        %548 = vmatpush2.msra.mxu0 0.0
        %549 = vmatprep.subr.mxu0 0.0
        %550 = vmatpush2.msra.mxu0 0.0
        %551 = vmatprep.subr.mxu0 0.0
        %552 = vmatpush2.msra.mxu0 0.0
        %553 = vmatprep.subr.mxu0 0.0
        %554 = vmatpush2.msra.mxu0 0.0
        %555 = vmatprep.subr.mxu0 0.0
        %556 = vmatpush2.msra.mxu0 0.0
        %557 = vmatprep.subr.mxu0 0.0
        %558 = vmatpush2.msra.mxu0 0.0
        %559 = vmatprep.subr.mxu0 0.0
        %560 = vmatpush2.msra.mxu0 0.0
        %561 = vmatprep.subr.mxu0 0.0
        %562 = vmatpush2.msra.mxu0 0.0
        %563 = vmatprep.subr.mxu0 0.0
        %564 = vmatpush2.msra.mxu0 0.0
        %565 = vmatprep.subr.mxu0 0.0
        %566 = vmatpush2.msra.mxu0 0.0
        %567 = vmatprep.mubr.f32.mxu0 0.0
        %568 = vmatmul.mubr.f32.gmra.mxu0 %v456
        %v569 = vpop.f32.mrf.mxu0
        %v570 = vadd.f32 0.0, %v569
        %v571 = vpop.f32.mrf.mxu0
        %572 = vmatprep.mubr.f32.mxu0 0.0
        %573 = vmatmul.mubr.f32.gmra.mxu0 %v459
        %v574 = vpop.f32.mrf.mxu0
        %v575 = vadd.f32 0.0, %v574
        %v576 = vpop.f32.mrf.mxu0
        %577 = vmatprep.mubr.f32.mxu0 0.0
        %578 = vmatmul.mubr.f32.gmra.mxu0 %v462
        %v579 = vpop.f32.mrf.mxu0
        %v580 = vadd.f32 0.0, %v579
        %v581 = vpop.f32.mrf.mxu0
        %582 = vmatprep.mubr.f32.mxu0 0.0
        %583 = vmatmul.mubr.f32.gmra.mxu0 %v465
        %v584 = vpop.f32.mrf.mxu0
        %v585 = vadd.f32 0.0, %v584
        %v586 = vpop.f32.mrf.mxu0
        %587 = vmatprep.mubr.f32.mxu0 0.0
        %588 = vmatmul.mubr.f32.gmra.mxu0 %v468
        %v589 = vpop.f32.mrf.mxu0
        %v590 = vadd.f32 0.0, %v589
        %v591 = vpop.f32.mrf.mxu0
        %592 = vmatprep.mubr.f32.mxu0 0.0
        %593 = vmatmul.mubr.f32.gmra.mxu0 %v471
        %v594 = vpop.f32.mrf.mxu0
        %v595 = vadd.f32 0.0, %v594
        %v596 = vpop.f32.mrf.mxu0
        %597 = vmatprep.mubr.f32.mxu0 0.0
        %598 = vmatmul.mubr.f32.gmra.mxu0 %v474
        %v599 = vpop.f32.mrf.mxu0
        %v600 = vadd.f32 0.0, %v599
        %v601 = vpop.f32.mrf.mxu0
        %602 = vmatprep.mubr.f32.mxu0 0.0
        %603 = vmatmul.mubr.f32.gmra.mxu0 %v477
        %v604 = vpop.f32.mrf.mxu0
        %v605 = vadd.f32 0.0, %v604
        %v606 = vpop.f32.mrf.mxu0
        %607 = vmatprep.mubr.f32.mxu0 0.0
        %608 = vmatmul.mubr.f32.gmra.mxu0 %v480
        %v609 = vpop.f32.mrf.mxu0
        %v610 = vadd.f32 0.0, %v609
        %v611 = vpop.f32.mrf.mxu0
        %612 = vmatprep.mubr.f32.mxu0 0.0
        %613 = vmatmul.mubr.f32.gmra.mxu0 %v483
        %v614 = vpop.f32.mrf.mxu0
        %v615 = vadd.f32 0.0, %v614
        %v616 = vpop.f32.mrf.mxu0
        %617 = vmatprep.mubr.f32.mxu0 0.0
        %618 = vmatmul.mubr.f32.gmra.mxu0 %v486
        %v619 = vpop.f32.mrf.mxu0
        %v620 = vadd.f32 0.0, %v619
        %v621 = vpop.f32.mrf.mxu0
        %622 = vmatprep.mubr.f32.mxu0 0.0
        %623 = vmatmul.mubr.f32.gmra.mxu0 %v489
        %v624 = vpop.f32.mrf.mxu0
        %v625 = vadd.f32 0.0, %v624
        %v626 = vpop.f32.mrf.mxu0
        %627 = vmatprep.mubr.f32.mxu0 0.0
        %628 = vmatmul.mubr.f32.gmra.mxu0 %v492
        %v629 = vpop.f32.mrf.mxu0
        %v630 = vadd.f32 0.0, %v629
        %v631 = vpop.f32.mrf.mxu0
        %632 = vmatprep.mubr.f32.mxu0 0.0
        %633 = vmatmul.mubr.f32.gmra.mxu0 %v495
        %v634 = vpop.f32.mrf.mxu0
        %v635 = vadd.f32 0.0, %v634
        %v636 = vpop.f32.mrf.mxu0
        %637 = vmatprep.mubr.f32.mxu0 0.0
        %638 = vmatmul.mubr.f32.gmra.mxu0 %v498
        %v639 = vpop.f32.mrf.mxu0
        %v640 = vadd.f32 0.0, %v639
        %v641 = vpop.f32.mrf.mxu0
        %642 = vmatprep.mubr.f32.mxu0 0.0
        %643 = vmatmul.mubr.f32.gmra.mxu0 %v501
        %v644 = vpop.f32.mrf.mxu0
        %v645 = vadd.f32 0.0, %v644
        %v646 = vpop.f32.mrf.mxu0
        %647 = vdwg.mxu0
        %vm648 = vcmask 523264
        %649 = vst.msk [vmem:[%s218] sm:$0xff] %vm648, %v570
        %650 = vst.msk [vmem:[%s218 + $0x8] sm:$0xff] %vm648, %v575
        %651 = vst.msk [vmem:[%s218 + $0x10] sm:$0xff] %vm648, %v580
        %652 = vst.msk [vmem:[%s218 + $0x18] sm:$0xff] %vm648, %v585
        %653 = vst.msk [vmem:[%s218 + $0x20] sm:$0xff] %vm648, %v590
        %654 = vst.msk [vmem:[%s218 + $0x28] sm:$0xff] %vm648, %v595
        %655 = vst.msk [vmem:[%s218 + $0x30] sm:$0xff] %vm648, %v600
        %656 = vst.msk [vmem:[%s218 + $0x38] sm:$0xff] %vm648, %v605
        %657 = vst.msk [vmem:[%s218 + $0x40] sm:$0xff] %vm648, %v610
        %658 = vst.msk [vmem:[%s218 + $0x48] sm:$0xff] %vm648, %v615
        %659 = vst.msk [vmem:[%s218 + $0x50] sm:$0xff] %vm648, %v620
        %660 = vst.msk [vmem:[%s218 + $0x58] sm:$0xff] %vm648, %v625
        %661 = vst.msk [vmem:[%s218 + $0x60] sm:$0xff] %vm648, %v630
        %662 = vst.msk [vmem:[%s218 + $0x68] sm:$0xff] %vm648, %v635
        %663 = vst.msk [vmem:[%s218 + $0x70] sm:$0xff] %vm648, %v640
        %664 = vst.msk [vmem:[%s218 + $0x78] sm:$0xff] %vm648, %v645
        %s665 = sand.u32 %s97, 1
        %s666 = scalar_lea.sflag [#allocation4], %s665
        %s667 = sand.u32 %s97, 1
        %s668 = smul.addr %s667, 128
        %s669 = scalar_lea.vmem [#allocation8], %s668
        // Predicated region
        $region45: #{tpu_custom_call.1} parent=31 // pred_check
          %p670 = pneg %p107
        $region46: #{tpu_custom_call.1} parent=31 // pred_check_branch
          %672 = sbr.rel (%p670) target = $region48
        $region47: #{tpu_custom_call.1} parent=31 // pred_region
          %s673 = smul.u32 2, %s21
          %s675 = ssub.s32 2048, 2048
          %676 = vsyncadd %s666, %s675
          %s677 = smul.addr %s673, 8
          %s678 = smul.addr %s677, 128
          %s679 = scalar_lea.hbm %s3, %s678
          %s680 = sshll.u32 %s669, 4
          %s681 = int_to_ptr.vmem [resolvable:$true] %s680
          %686 = dma.vmem_to_hbm [thread:$0]  %s681, 2048, %s679, %s666, 128, 128, 8
        $region48: #{tpu_custom_call.1} parent=31 // pred_fallthru
          _
      $region32: #{tpu_custom_call.1} parent=5 // pred_fallthru
        _
      %p687 = scmp.le.s32.totalorder 2, %s16
      // Predicated region
      $region49: #{tpu_custom_call.1} parent=5 // pred_check
        %p688 = pneg %p687
      $region50: #{tpu_custom_call.1} parent=5 // pred_check_branch
        %690 = sbr.rel (%p688) target = $region52
      $region51: #{tpu_custom_call.1} parent=5 // pred_region
        %s691 = ssub.s32 %s16, 2
        // Predicated region
        $region53: #{tpu_custom_call.1} parent=51 // pred_check
          %p692 = pneg %p113
        $region54: #{tpu_custom_call.1} parent=51 // pred_check_branch
          %694 = sbr.rel (%p692) target = $region56
        $region55: #{tpu_custom_call.1} parent=51 // pred_region
          %s695 = sand.u32 %s98, 1
          %s696 = scalar_lea.sflag [#allocation4], %s695
          %s697 = sand.u32 %s98, 1
          %s698 = smul.addr %s697, 128
          %s699 = scalar_lea.vmem [#allocation8], %s698
          %700 = dma.done %s696, 2048
        $region56: #{tpu_custom_call.1} parent=51 // pred_fallthru
          _
      $region52: #{tpu_custom_call.1} parent=5 // pred_fallthru
        _
    $region6: #{tpu_custom_call.1} parent=1 // loop_footer
      %s20 = sadd.s32 1, %s16
    $region7: #{tpu_custom_call.1} parent=1 // loop_footer_branch
      %15 = sbr.rel target = $region3
    $region8: #{tpu_custom_call.1} parent=1 // loop_exit
      _
    %701 = vsyncpa [#allocation3], 1
    %s702 = scalar_lea.sflag [#allocation3], 1
    %703 = vsyncpa %s702, 1
    %704 = vsyncpa [#allocation6], 1
    %s705 = scalar_lea.sflag [#allocation6], 1
    %706 = vsyncpa %s705, 1
    %707 = vsyncpa [#allocation4], 1
    %s708 = scalar_lea.sflag [#allocation4], 1
    %709 = vsyncpa %s708, 1

// kernel: tpu_custom_call.1
$region0: #{tpu_custom_call.1}
  #allocation0 [shape = 'u32[]', space=smem, size = 0x4, offset = 0x4, fixed_abs, tag = 'smem constant byte address 0x4 - core index']
  #allocation1 [shape = 'u32[144,128]{1,0:T(1,128)}', space=vmem, size = 0x12000, scoped, tag = 'internal scratch']
  %s0 = inlined_call_operand.hbm [shape: f32[16,64], index: 0, kind: input, shape index: {}]
  %s1 = inlined_call_operand.hbm [shape: f32[8,16,16], index: 1, kind: input, shape index: {}]
  %s2 = inlined_call_operand.hbm [shape: f32[16,64], index: 2, kind: input, shape index: {}]
  %s3 = inlined_call_operand.hbm [shape: f32[8,64,64], index: 3, kind: output, shape index: {}]
  %s4 = sld [smem:[#allocation0]]
  $region57: #{tpu_custom_call.1} parent=0
    _
  %s6 = ssub.s32 1, %s4
  %s7 = scalar_select 0, %s6, %s4
  $region1: #{tpu_custom_call.1} parent=0
    #allocation2 [shape = 'u8[8192]{0}', space=vmem, size = 0x2000, scoped, tag = 'input window, operand 0, single buffered']
    #allocation3 [shape = 's32[2]{0}', space=sflag, size = 0x8, scoped, tag = 'scoped memory for tpu_custom_call.1']
    #allocation4 [shape = 's32[2]{0}', space=sflag, size = 0x8, scoped, tag = 'scoped memory for tpu_custom_call.1']
    #allocation5 [shape = 'u8[32768]{0}', space=vmem, size = 0x8000, scoped, tag = 'input window, operand 1']
    #allocation6 [shape = 's32[2]{0}', space=sflag, size = 0x8, scoped, tag = 'scoped memory for tpu_custom_call.1']
    #allocation7 [shape = 'u8[8192]{0}', space=vmem, size = 0x2000, scoped, tag = 'input window, operand 2, single buffered']
    #allocation8 [shape = 'u8[131072]{0}', space=vmem, size = 0x20000, scoped, tag = 'output window, operand 0']
    %8 = vsyncpa [#allocation3], 0
    %9 = vsyncpa [#allocation6], 0
    %s10 = scalar_lea.sflag [#allocation6], 1
    %11 = vsyncpa %s10, 0
    %12 = vsyncpa [#allocation4], 0
    %s13 = scalar_lea.sflag [#allocation4], 1
    %14 = vsyncpa %s13, 0
    loop: start=0, step=1, limit=6
    $region2: #{tpu_custom_call.1} parent=1 // loop_pre_header
      _
    $region3: #{tpu_custom_call.1} parent=1 // loop_header
      %s16 = sphi 0, %s20
      %p17 = scmp.ge.s32.totalorder %s16, 6
      %s24 = sphi 0, %s24
      %s26 = sphi 0, %s24
      %s27 = sphi 0, %s26
      %s41 = sphi 0, %s27
      %s47 = sphi 0, %s49
      %s50 = sphi 0, %s47
      %s51 = sphi 0, %s50
      %s67 = sphi 0, %s51
      %s71 = sphi 0, %s71
      %s73 = sphi 0, %s71
      %s74 = sphi 0, %s73
      %s88 = sphi 0, %s74
      %s94 = sphi 0, %s96
      %s97 = sphi 0, %s94
      %s98 = sphi 0, %s97
      %s114 = sphi 0, %s98
    $region4: #{tpu_custom_call.1} parent=1 // loop_header_branch
      %19 = sbr.rel (%p17) target = $region8
    $region5: #{tpu_custom_call.1} parent=1 // loop_body
      %s21 = ssub.s32 %s16, 1
      %s22 = ssub.s32 %s16, 2
      %s23 = sadd.s32 %s16, 1
      %s25 = sadd.s32 %s24, 1
      %p28 = scmp.eq.s32.totalorder %s16, 3
      %p29 = scmp.ne.s32.totalorder %s24, %s26
      %p30 = scmp.eq.s32.totalorder %s16, 0
      %p31 = por %p29, %p30
      %p32 = scmp.ne.s32.totalorder %s24, %s26
      %p33 = scmp.eq.s32.totalorder %s21, 3
      %p34 = por %p32, %p33
      %p35 = scmp.ne.s32.totalorder %s26, %s27
      %p36 = scmp.eq.s32.totalorder %s21, 0
      %p37 = por %p35, %p36
      %p38 = scmp.ne.s32.totalorder %s26, %s27
      %p39 = scmp.eq.s32.totalorder %s22, 3
      %p40 = por %p38, %p39
      %p42 = scmp.ne.s32.totalorder %s27, %s41
      %p43 = scmp.eq.s32.totalorder %s22, 0
      %p44 = por %p42, %p43
      %s45 = ssub.s32 %s16, %s23
      %p46 = scmp.eq.s32.totalorder %s45, 0
      %s48 = sadd.s32 %s47, 1
      %s49 = scalar_select %p46, %s47, %s48
      %p52 = pneg %p46
      %p53 = scmp.eq.s32.totalorder %s16, 3
      %p54 = por %p52, %p53
      %p55 = scmp.ne.s32.totalorder %s47, %s50
      %p56 = scmp.eq.s32.totalorder %s16, 0
      %p57 = por %p55, %p56
      %p58 = scmp.ne.s32.totalorder %s47, %s50
      %p59 = scmp.eq.s32.totalorder %s21, 3
      %p60 = por %p58, %p59
      %p61 = scmp.ne.s32.totalorder %s50, %s51
      %p62 = scmp.eq.s32.totalorder %s21, 0
      %p63 = por %p61, %p62
      %p64 = scmp.ne.s32.totalorder %s50, %s51
      %p65 = scmp.eq.s32.totalorder %s22, 3
      %p66 = por %p64, %p65
      %p68 = scmp.ne.s32.totalorder %s51, %s67
      %p69 = scmp.eq.s32.totalorder %s22, 0
      %p70 = por %p68, %p69
      %s72 = sadd.s32 %s71, 1
      %p75 = scmp.eq.s32.totalorder %s16, 3
      %p76 = scmp.ne.s32.totalorder %s71, %s73
      %p77 = scmp.eq.s32.totalorder %s16, 0
      %p78 = por %p76, %p77
      %p79 = scmp.ne.s32.totalorder %s71, %s73
      %p80 = scmp.eq.s32.totalorder %s21, 3
      %p81 = por %p79, %p80
      %p82 = scmp.ne.s32.totalorder %s73, %s74
      %p83 = scmp.eq.s32.totalorder %s21, 0
      %p84 = por %p82, %p83
      %p85 = scmp.ne.s32.totalorder %s73, %s74
      %p86 = scmp.eq.s32.totalorder %s22, 3
      %p87 = por %p85, %p86
      %p89 = scmp.ne.s32.totalorder %s74, %s88
      %p90 = scmp.eq.s32.totalorder %s22, 0
      %p91 = por %p89, %p90
      %s92 = ssub.s32 %s16, %s23
      %p93 = scmp.eq.s32.totalorder %s92, 0
      %s95 = sadd.s32 %s94, 1
      %s96 = scalar_select %p93, %s94, %s95
      %p99 = pneg %p93
      %p100 = scmp.eq.s32.totalorder %s16, 3
      %p101 = por %p99, %p100
      %p102 = scmp.ne.s32.totalorder %s94, %s97
      %p103 = scmp.eq.s32.totalorder %s16, 0
      %p104 = por %p102, %p103
      %p105 = scmp.ne.s32.totalorder %s94, %s97
      %p106 = scmp.eq.s32.totalorder %s21, 3
      %p107 = por %p105, %p106
      %p108 = scmp.ne.s32.totalorder %s97, %s98
      %p109 = scmp.eq.s32.totalorder %s21, 0
      %p110 = por %p108, %p109
      %p111 = scmp.ne.s32.totalorder %s97, %s98
      %p112 = scmp.eq.s32.totalorder %s22, 3
      %p113 = por %p111, %p112
      %p115 = scmp.ne.s32.totalorder %s98, %s114
      %p116 = scmp.eq.s32.totalorder %s22, 0
      %p117 = por %p115, %p116
      %p118 = scmp.le.s32.totalorder 1, %s16
      %p119 = scmp.lt.s32.totalorder %s16, 5
      %p120 = pnand %p118, %p119
      %p121 = pneg %p120
      // Predicated region
      $region9: #{tpu_custom_call.1} parent=5 // pred_check
        _
      $region10: #{tpu_custom_call.1} parent=5 // pred_check_branch
        %123 = sbr.rel (%p120) target = $region12
      $region11: #{tpu_custom_call.1} parent=5 // pred_region
        %s124 = ssub.s32 %s16, 1
        // Predicated region
        $region13: #{tpu_custom_call.1} parent=11 // pred_check
          %p125 = pneg %p37
        $region14: #{tpu_custom_call.1} parent=11 // pred_check_branch
          %127 = sbr.rel (%p125) target = $region16
        $region15: #{tpu_custom_call.1} parent=11 // pred_region
          %s129 = ssub.s32 256, 256
          %130 = vsyncadd [#allocation3], %s129
          %s131 = sshll.u32 [#allocation2], 4
          %s132 = int_to_ptr.vmem [resolvable:$true] %s131
          %137 = dma.hbm_to_vmem [thread:$0]  %s0, 256, %s132, [#allocation3], 128, 128, 8
        $region16: #{tpu_custom_call.1} parent=11 // pred_fallthru
          _
        // Predicated region
        $region17: #{tpu_custom_call.1} parent=11 // pred_check
          %p138 = pneg %p84
        $region18: #{tpu_custom_call.1} parent=11 // pred_check_branch
          %140 = sbr.rel (%p138) target = $region20
        $region19: #{tpu_custom_call.1} parent=11 // pred_region
          %s142 = ssub.s32 256, 256
          %143 = vsyncadd [#allocation6], %s142
          %s144 = sshll.u32 [#allocation7], 4
          %s145 = int_to_ptr.vmem [resolvable:$true] %s144
          %150 = dma.hbm_to_vmem [thread:$0]  %s2, 256, %s145, [#allocation6], 128, 128, 8
        $region20: #{tpu_custom_call.1} parent=11 // pred_fallthru
          _
      $region12: #{tpu_custom_call.1} parent=5 // pred_fallthru
        _
      %p151 = scmp.lt.s32.totalorder %s16, 4
      // Predicated region
      $region21: #{tpu_custom_call.1} parent=5 // pred_check
        %p152 = pneg %p151
      $region22: #{tpu_custom_call.1} parent=5 // pred_check_branch
        %154 = sbr.rel (%p152) target = $region24
      $region23: #{tpu_custom_call.1} parent=5 // pred_region
        // Predicated region
        $region25: #{tpu_custom_call.1} parent=23 // pred_check
          %p155 = pneg %p57
        $region26: #{tpu_custom_call.1} parent=23 // pred_check_branch
          %157 = sbr.rel (%p155) target = $region28
        $region27: #{tpu_custom_call.1} parent=23 // pred_region
          %s158 = sand.u32 %s16, 1
          %s159 = scalar_lea.sflag [#allocation6], %s158
          %s160 = sand.u32 %s47, 1
          %s161 = smul.addr %s160, 32
          %s162 = scalar_lea.vmem [#allocation5], %s161
          %s163 = smul.u32 2, %s16
          %s165 = ssub.s32 512, 512
          %166 = vsyncadd %s159, %s165
          %s167 = smul.addr %s163, 2
          %s168 = smul.addr %s167, 128
          %s169 = scalar_lea.hbm %s1, %s168
          %s170 = sshll.u32 %s162, 4
          %s171 = int_to_ptr.vmem [resolvable:$true] %s170
          %176 = dma.hbm_to_vmem [thread:$0]  %s169, 512, %s171, %s159, 128, 128, 8
        $region28: #{tpu_custom_call.1} parent=23 // pred_fallthru
          _
      $region24: #{tpu_custom_call.1} parent=5 // pred_fallthru
        _
      %p177 = scmp.le.s32.totalorder 1, %s16
      %p178 = scmp.lt.s32.totalorder %s16, 5
      %p179 = pnand %p177, %p178
      %p180 = pneg %p179
      // Predicated region
      $region29: #{tpu_custom_call.1} parent=5 // pred_check
        _
      $region30: #{tpu_custom_call.1} parent=5 // pred_check_branch
        %182 = sbr.rel (%p179) target = $region32
      $region31: #{tpu_custom_call.1} parent=5 // pred_region
        %s183 = ssub.s32 %s16, 1
        // Predicated region
        $region33: #{tpu_custom_call.1} parent=31 // pred_check
          %p184 = pneg %p37
        $region34: #{tpu_custom_call.1} parent=31 // pred_check_branch
          %186 = sbr.rel (%p184) target = $region36
        $region35: #{tpu_custom_call.1} parent=31 // pred_region
          %187 = dma.done [#allocation3], 256
        $region36: #{tpu_custom_call.1} parent=31 // pred_fallthru
          _
        %s188 = sand.u32 %s21, 1
        %s189 = scalar_lea.sflag [#allocation6], %s188
        %s190 = sand.u32 %s50, 1
        %s191 = smul.addr %s190, 32
        %s192 = scalar_lea.vmem [#allocation5], %s191
        // Predicated region
        $region37: #{tpu_custom_call.1} parent=31 // pred_check
          %p193 = pneg %p63
        $region38: #{tpu_custom_call.1} parent=31 // pred_check_branch
          %195 = sbr.rel (%p193) target = $region40
        $region39: #{tpu_custom_call.1} parent=31 // pred_region
          %196 = dma.done %s189, 512
        $region40: #{tpu_custom_call.1} parent=31 // pred_fallthru
          _
        // Predicated region
        $region41: #{tpu_custom_call.1} parent=31 // pred_check
          %p197 = pneg %p84
        $region42: #{tpu_custom_call.1} parent=31 // pred_check_branch
          %199 = sbr.rel (%p197) target = $region44
        $region43: #{tpu_custom_call.1} parent=31 // pred_region
          %200 = dma.done [#allocation6], 256
        $region44: #{tpu_custom_call.1} parent=31 // pred_fallthru
          _
        %p201 = pneg %p37
        %p202 = pneg %p34
        %s203 = sand.u32 %s21, 1
        %s204 = scalar_lea.sflag [#allocation6], %s203
        %s205 = sand.u32 %s50, 1
        %s206 = smul.addr %s205, 32
        %s207 = scalar_lea.vmem [#allocation5], %s206
        %p208 = pneg %p63
        %p209 = pneg %p60
        %p210 = pneg %p84
        %p211 = pneg %p81
        %p212 = pneg %p110
        %p213 = pneg %p107
        %s214 = sand.u32 %s97, 1
        %s215 = scalar_lea.sflag [#allocation4], %s214
        %s216 = sand.u32 %s97, 1
        %s217 = smul.addr %s216, 128
        %s218 = scalar_lea.vmem [#allocation8], %s217
        %s219 = smul.u32 2, %s21
        %s220 = smul.u32 2, %s21
        %v221 = vld [vmem:[%s192] sm:$0xff]
        %v222 = vld [vmem:[%s192 + $0x8] sm:$0xff]
        %v223 = vld [vmem:[%s192 + $0x10] sm:$0xff]
        %v224 = vld [vmem:[%s192 + $0x18] sm:$0xff]
        %225 = vxpose.xlu0.b32.start [1/16] %v221, 128
        %226 = vxpose.xlu0.b32.cont [2/16] %v222, 128
        %227 = vxpose.xlu0.b32.cont [3/16] 0.0, 128
        %228 = vxpose.xlu0.b32.cont [4/16] 0.0, 128
        %229 = vxpose.xlu0.b32.cont [5/16] 0.0, 128
        %230 = vxpose.xlu0.b32.cont [6/16] 0.0, 128
        %231 = vxpose.xlu0.b32.cont [7/16] 0.0, 128
        %232 = vxpose.xlu0.b32.cont [8/16] 0.0, 128
        %233 = vxpose.xlu0.b32.cont [9/16] 0.0, 128
        %234 = vxpose.xlu0.b32.cont [10/16] 0.0, 128
        %235 = vxpose.xlu0.b32.cont [11/16] 0.0, 128
        %236 = vxpose.xlu0.b32.cont [12/16] 0.0, 128
        %237 = vxpose.xlu0.b32.cont [13/16] 0.0, 128
        %238 = vxpose.xlu0.b32.cont [14/16] 0.0, 128
        %239 = vxpose.xlu0.b32.cont [15/16] 0.0, 128
        %240 = vxpose.xlu0.b32.end [16/16] 0.0, 128
        %v241 = vpop.trf.xlu0
        %v242 = vpop.trf.xlu0
        %v243 = vpop.trf.xlu0
        %v244 = vpop.trf.xlu0
        %v245 = vpop.trf.xlu0
        %v246 = vpop.trf.xlu0
        %v247 = vpop.trf.xlu0
        %v248 = vpop.trf.xlu0
        %v249 = vpop.trf.xlu0
        %v250 = vpop.trf.xlu0
        %v251 = vpop.trf.xlu0
        %v252 = vpop.trf.xlu0
        %v253 = vpop.trf.xlu0
        %v254 = vpop.trf.xlu0
        %v255 = vpop.trf.xlu0
        %v256 = vpop.trf.xlu0
        %257 = vxpose.xlu0.b32.start [1/16] %v223, 128
        %258 = vxpose.xlu0.b32.cont [2/16] %v224, 128
        %259 = vxpose.xlu0.b32.cont [3/16] 0.0, 128
        %260 = vxpose.xlu0.b32.cont [4/16] 0.0, 128
        %261 = vxpose.xlu0.b32.cont [5/16] 0.0, 128
        %262 = vxpose.xlu0.b32.cont [6/16] 0.0, 128
        %263 = vxpose.xlu0.b32.cont [7/16] 0.0, 128
        %264 = vxpose.xlu0.b32.cont [8/16] 0.0, 128
        %265 = vxpose.xlu0.b32.cont [9/16] 0.0, 128
        %266 = vxpose.xlu0.b32.cont [10/16] 0.0, 128
        %267 = vxpose.xlu0.b32.cont [11/16] 0.0, 128
        %268 = vxpose.xlu0.b32.cont [12/16] 0.0, 128
        %269 = vxpose.xlu0.b32.cont [13/16] 0.0, 128
        %270 = vxpose.xlu0.b32.cont [14/16] 0.0, 128
        %271 = vxpose.xlu0.b32.cont [15/16] 0.0, 128
        %272 = vxpose.xlu0.b32.end [16/16] 0.0, 128
        %v273 = vpop.trf.xlu0
        %v274 = vpop.trf.xlu0
        %v275 = vpop.trf.xlu0
        %v276 = vpop.trf.xlu0
        %v277 = vpop.trf.xlu0
        %v278 = vpop.trf.xlu0
        %v279 = vpop.trf.xlu0
        %v280 = vpop.trf.xlu0
        %v281 = vpop.trf.xlu0
        %v282 = vpop.trf.xlu0
        %v283 = vpop.trf.xlu0
        %v284 = vpop.trf.xlu0
        %v285 = vpop.trf.xlu0
        %v286 = vpop.trf.xlu0
        %v287 = vpop.trf.xlu0
        %v288 = vpop.trf.xlu0
        %v289 = vld [vmem:[#allocation2] sm:$0xff]
        %v290 = vld [vmem:[#allocation2 + $0x8] sm:$0xff]
        %vm291 = vcmask 130048
        %v293 = vsel %vm291, %v241, 0
        %v296 = vsel %vm291, %v242, 0
        %v299 = vsel %vm291, %v273, 0
        %v302 = vsel %vm291, %v274, 0
        %304 = vmatprep.subr.mxu0 0.0
        %305 = vmatpush1.msra.mxu0 0.0
        %306 = vmatprep.subr.mxu0 0.0
        %307 = vmatpush1.msra.mxu0 0.0
        %308 = vmatprep.subr.mxu0 0.0
        %309 = vmatpush1.msra.mxu0 0.0
        %310 = vmatprep.subr.mxu0 0.0
        %311 = vmatpush1.msra.mxu0 0.0
        %312 = vmatprep.subr.mxu0 0.0
        %313 = vmatpush1.msra.mxu0 0.0
        %314 = vmatprep.subr.mxu0 0.0
        %315 = vmatpush1.msra.mxu0 0.0
        %316 = vmatprep.subr.mxu0 0.0
        %317 = vmatpush1.msra.mxu0 0.0
        %318 = vmatprep.subr.mxu0 0.0
        %319 = vmatpush1.msra.mxu0 0.0
        %320 = vmatprep.subr.mxu0 0.0
        %321 = vmatpush1.msra.mxu0 0.0
        %322 = vmatprep.subr.mxu0 0.0
        %323 = vmatpush1.msra.mxu0 0.0
        %324 = vmatprep.subr.mxu0 0.0
        %325 = vmatpush1.msra.mxu0 0.0
        %326 = vmatprep.subr.mxu0 0.0
        %327 = vmatpush1.msra.mxu0 0.0
        %328 = vmatprep.subr.mxu0 0.0
        %329 = vmatpush1.msra.mxu0 0.0
        %330 = vmatprep.subr.mxu0 0.0
        %331 = vmatpush1.msra.mxu0 0.0
        %332 = vmatprep.subr.mxu0 0.0
        %333 = vmatpush1.msra.mxu0 %v290
        %334 = vmatprep.subr.mxu0 0.0
        %335 = vmatpush1.msra.mxu0 %v289
        %336 = vmatprep.subr.mxu0 0.0
        %337 = vmatpush2.msra.mxu0 0.0
        %338 = vmatprep.subr.mxu0 0.0
        %339 = vmatpush2.msra.mxu0 0.0
        %340 = vmatprep.subr.mxu0 0.0
        %341 = vmatpush2.msra.mxu0 0.0
        %342 = vmatprep.subr.mxu0 0.0
        %343 = vmatpush2.msra.mxu0 0.0
        %344 = vmatprep.subr.mxu0 0.0
        %345 = vmatpush2.msra.mxu0 0.0
        %346 = vmatprep.subr.mxu0 0.0
        %347 = vmatpush2.msra.mxu0 0.0
        %348 = vmatprep.subr.mxu0 0.0
        %349 = vmatpush2.msra.mxu0 0.0
        %350 = vmatprep.subr.mxu0 0.0
        %351 = vmatpush2.msra.mxu0 0.0
        %352 = vmatprep.subr.mxu0 0.0
        %353 = vmatpush2.msra.mxu0 0.0
        %354 = vmatprep.subr.mxu0 0.0
        %355 = vmatpush2.msra.mxu0 0.0
        %356 = vmatprep.subr.mxu0 0.0
        %357 = vmatpush2.msra.mxu0 0.0
        %358 = vmatprep.subr.mxu0 0.0
        %359 = vmatpush2.msra.mxu0 0.0
        %360 = vmatprep.subr.mxu0 0.0
        %361 = vmatpush2.msra.mxu0 0.0
        %362 = vmatprep.subr.mxu0 0.0
        %363 = vmatpush2.msra.mxu0 0.0
        %364 = vmatprep.subr.mxu0 0.0
        %365 = vmatpush2.msra.mxu0 0.0
        %366 = vmatprep.subr.mxu0 0.0
        %367 = vmatpush2.msra.mxu0 0.0
        %368 = vmatprep.mubr.f32.mxu0 0.0
        %369 = vmatmul.mubr.f32.gmra.mxu0 %v293
        %v370 = vpop.f32.mrf.mxu0
        %v371 = vadd.f32 0.0, %v370
        %v372 = vpop.f32.mrf.mxu0
        %373 = vmatprep.mubr.f32.mxu0 0.0
        %374 = vmatmul.mubr.f32.gmra.mxu0 %v296
        %v375 = vpop.f32.mrf.mxu0
        %v376 = vadd.f32 0.0, %v375
        %v377 = vpop.f32.mrf.mxu0
        %378 = vmatprep.mubr.f32.mxu0 0.0
        %379 = vmatmul.mubr.f32.gmra.mxu0 %v299
        %v380 = vpop.f32.mrf.mxu0
        %v381 = vadd.f32 0.0, %v380
        %v382 = vpop.f32.mrf.mxu0
        %383 = vmatprep.mubr.f32.mxu0 0.0
        %384 = vmatmul.mubr.f32.gmra.mxu0 %v302
        %v385 = vpop.f32.mrf.mxu0
        %v386 = vadd.f32 0.0, %v385
        %v387 = vpop.f32.mrf.mxu0
        %388 = vdwg.mxu0
        %389 = vxpose.xlu0.b32.start [1/16] %v371, 128
        %390 = vxpose.xlu0.b32.cont [2/16] %v376, 128
        %391 = vxpose.xlu0.b32.cont [3/16] 0.0, 128
        %392 = vxpose.xlu0.b32.cont [4/16] 0.0, 128
        %393 = vxpose.xlu0.b32.cont [5/16] 0.0, 128
        %394 = vxpose.xlu0.b32.cont [6/16] 0.0, 128
        %395 = vxpose.xlu0.b32.cont [7/16] 0.0, 128
        %396 = vxpose.xlu0.b32.cont [8/16] 0.0, 128
        %397 = vxpose.xlu0.b32.cont [9/16] 0.0, 128
        %398 = vxpose.xlu0.b32.cont [10/16] 0.0, 128
        %399 = vxpose.xlu0.b32.cont [11/16] 0.0, 128
        %400 = vxpose.xlu0.b32.cont [12/16] 0.0, 128
        %401 = vxpose.xlu0.b32.cont [13/16] 0.0, 128
        %402 = vxpose.xlu0.b32.cont [14/16] 0.0, 128
        %403 = vxpose.xlu0.b32.cont [15/16] 0.0, 128
        %404 = vxpose.xlu0.b32.end [16/16] 0.0, 128
        %v405 = vpop.trf.xlu0
        %v406 = vpop.trf.xlu0
        %v407 = vpop.trf.xlu0
        %v408 = vpop.trf.xlu0
        %v409 = vpop.trf.xlu0
        %v410 = vpop.trf.xlu0
        %v411 = vpop.trf.xlu0
        %v412 = vpop.trf.xlu0
        %v413 = vpop.trf.xlu0
        %v414 = vpop.trf.xlu0
        %v415 = vpop.trf.xlu0
        %v416 = vpop.trf.xlu0
        %v417 = vpop.trf.xlu0
        %v418 = vpop.trf.xlu0
        %v419 = vpop.trf.xlu0
        %v420 = vpop.trf.xlu0
        %421 = vxpose.xlu0.b32.start [1/16] %v381, 128
        %422 = vxpose.xlu0.b32.cont [2/16] %v386, 128
        %423 = vxpose.xlu0.b32.cont [3/16] 0.0, 128
        %424 = vxpose.xlu0.b32.cont [4/16] 0.0, 128
        %425 = vxpose.xlu0.b32.cont [5/16] 0.0, 128
        %426 = vxpose.xlu0.b32.cont [6/16] 0.0, 128
        %427 = vxpose.xlu0.b32.cont [7/16] 0.0, 128
        %428 = vxpose.xlu0.b32.cont [8/16] 0.0, 128
        %429 = vxpose.xlu0.b32.cont [9/16] 0.0, 128
        %430 = vxpose.xlu0.b32.cont [10/16] 0.0, 128
        %431 = vxpose.xlu0.b32.cont [11/16] 0.0, 128
        %432 = vxpose.xlu0.b32.cont [12/16] 0.0, 128
        %433 = vxpose.xlu0.b32.cont [13/16] 0.0, 128
        %434 = vxpose.xlu0.b32.cont [14/16] 0.0, 128
        %435 = vxpose.xlu0.b32.cont [15/16] 0.0, 128
        %436 = vxpose.xlu0.b32.end [16/16] 0.0, 128
        %v437 = vpop.trf.xlu0
        %v438 = vpop.trf.xlu0
        %v439 = vpop.trf.xlu0
        %v440 = vpop.trf.xlu0
        %v441 = vpop.trf.xlu0
        %v442 = vpop.trf.xlu0
        %v443 = vpop.trf.xlu0
        %v444 = vpop.trf.xlu0
        %v445 = vpop.trf.xlu0
        %v446 = vpop.trf.xlu0
        %v447 = vpop.trf.xlu0
        %v448 = vpop.trf.xlu0
        %v449 = vpop.trf.xlu0
        %v450 = vpop.trf.xlu0
        %v451 = vpop.trf.xlu0
        %v452 = vpop.trf.xlu0
        %v453 = vld [vmem:[#allocation7] sm:$0xff]
        %v454 = vld [vmem:[#allocation7 + $0x8] sm:$0xff]
        %v456 = vsel %vm291, %v405, 0
        %v459 = vsel %vm291, %v406, 0
        %v462 = vsel %vm291, %v407, 0
        %v465 = vsel %vm291, %v408, 0
        %v468 = vsel %vm291, %v409, 0
        %v471 = vsel %vm291, %v410, 0
        %v474 = vsel %vm291, %v411, 0
        %v477 = vsel %vm291, %v412, 0
        %v480 = vsel %vm291, %v437, 0
        %v483 = vsel %vm291, %v438, 0
        %v486 = vsel %vm291, %v439, 0
        %v489 = vsel %vm291, %v440, 0
        %v492 = vsel %vm291, %v441, 0
        %v495 = vsel %vm291, %v442, 0
        %v498 = vsel %vm291, %v443, 0
        %v501 = vsel %vm291, %v444, 0
        %503 = vmatprep.subr.mxu0 0.0
        %504 = vmatpush1.msra.mxu0 0.0
        %505 = vmatprep.subr.mxu0 0.0
        %506 = vmatpush1.msra.mxu0 0.0
        %507 = vmatprep.subr.mxu0 0.0
        %508 = vmatpush1.msra.mxu0 0.0
        %509 = vmatprep.subr.mxu0 0.0
        %510 = vmatpush1.msra.mxu0 0.0
        %511 = vmatprep.subr.mxu0 0.0
        %512 = vmatpush1.msra.mxu0 0.0
        %513 = vmatprep.subr.mxu0 0.0
        %514 = vmatpush1.msra.mxu0 0.0
        %515 = vmatprep.subr.mxu0 0.0
        %516 = vmatpush1.msra.mxu0 0.0
        %517 = vmatprep.subr.mxu0 0.0
        %518 = vmatpush1.msra.mxu0 0.0
        %519 = vmatprep.subr.mxu0 0.0
        %520 = vmatpush1.msra.mxu0 0.0
        %521 = vmatprep.subr.mxu0 0.0
        %522 = vmatpush1.msra.mxu0 0.0
        %523 = vmatprep.subr.mxu0 0.0
        %524 = vmatpush1.msra.mxu0 0.0
        %525 = vmatprep.subr.mxu0 0.0
        %526 = vmatpush1.msra.mxu0 0.0
        %527 = vmatprep.subr.mxu0 0.0
        %528 = vmatpush1.msra.mxu0 0.0
        %529 = vmatprep.subr.mxu0 0.0
        %530 = vmatpush1.msra.mxu0 0.0
        %531 = vmatprep.subr.mxu0 0.0
        %532 = vmatpush1.msra.mxu0 %v454
        %533 = vmatprep.subr.mxu0 0.0
        %534 = vmatpush1.msra.mxu0 %v453
        %535 = vmatprep.subr.mxu0 0.0
        %536 = vmatpush2.msra.mxu0 0.0
        %537 = vmatprep.subr.mxu0 0.0
        %538 = vmatpush2.msra.mxu0 0.0
        %539 = vmatprep.subr.mxu0 0.0
        %540 = vmatpush2.msra.mxu0 0.0
        %541 = vmatprep.subr.mxu0 0.0
        %542 = vmatpush2.msra.mxu0 0.0
        %543 = vmatprep.subr.mxu0 0.0
        %544 = vmatpush2.msra.mxu0 0.0
        %545 = vmatprep.subr.mxu0 0.0
        %546 = vmatpush2.msra.mxu0 0.0
        %547 = vmatprep.subr.mxu0 0.0
        %548 = vmatpush2.msra.mxu0 0.0
        %549 = vmatprep.subr.mxu0 0.0
        %550 = vmatpush2.msra.mxu0 0.0
        %551 = vmatprep.subr.mxu0 0.0
        %552 = vmatpush2.msra.mxu0 0.0
        %553 = vmatprep.subr.mxu0 0.0
        %554 = vmatpush2.msra.mxu0 0.0
        %555 = vmatprep.subr.mxu0 0.0
        %556 = vmatpush2.msra.mxu0 0.0
        %557 = vmatprep.subr.mxu0 0.0
        %558 = vmatpush2.msra.mxu0 0.0
        %559 = vmatprep.subr.mxu0 0.0
        %560 = vmatpush2.msra.mxu0 0.0
        %561 = vmatprep.subr.mxu0 0.0
        %562 = vmatpush2.msra.mxu0 0.0
        %563 = vmatprep.subr.mxu0 0.0
        %564 = vmatpush2.msra.mxu0 0.0
        %565 = vmatprep.subr.mxu0 0.0
        %566 = vmatpush2.msra.mxu0 0.0
        %567 = vmatprep.mubr.f32.mxu0 0.0
        %568 = vmatmul.mubr.f32.gmra.mxu0 %v456
        %v569 = vpop.f32.mrf.mxu0
        %v570 = vadd.f32 0.0, %v569
        %v571 = vpop.f32.mrf.mxu0
        %572 = vmatprep.mubr.f32.mxu0 0.0
        %573 = vmatmul.mubr.f32.gmra.mxu0 %v459
        %v574 = vpop.f32.mrf.mxu0
        %v575 = vadd.f32 0.0, %v574
        %v576 = vpop.f32.mrf.mxu0
        %577 = vmatprep.mubr.f32.mxu0 0.0
        %578 = vmatmul.mubr.f32.gmra.mxu0 %v462
        %v579 = vpop.f32.mrf.mxu0
        %v580 = vadd.f32 0.0, %v579
        %v581 = vpop.f32.mrf.mxu0
        %582 = vmatprep.mubr.f32.mxu0 0.0
        %583 = vmatmul.mubr.f32.gmra.mxu0 %v465
        %v584 = vpop.f32.mrf.mxu0
        %v585 = vadd.f32 0.0, %v584
        %v586 = vpop.f32.mrf.mxu0
        %587 = vmatprep.mubr.f32.mxu0 0.0
        %588 = vmatmul.mubr.f32.gmra.mxu0 %v468
        %v589 = vpop.f32.mrf.mxu0
        %v590 = vadd.f32 0.0, %v589
        %v591 = vpop.f32.mrf.mxu0
        %592 = vmatprep.mubr.f32.mxu0 0.0
        %593 = vmatmul.mubr.f32.gmra.mxu0 %v471
        %v594 = vpop.f32.mrf.mxu0
        %v595 = vadd.f32 0.0, %v594
        %v596 = vpop.f32.mrf.mxu0
        %597 = vmatprep.mubr.f32.mxu0 0.0
        %598 = vmatmul.mubr.f32.gmra.mxu0 %v474
        %v599 = vpop.f32.mrf.mxu0
        %v600 = vadd.f32 0.0, %v599
        %v601 = vpop.f32.mrf.mxu0
        %602 = vmatprep.mubr.f32.mxu0 0.0
        %603 = vmatmul.mubr.f32.gmra.mxu0 %v477
        %v604 = vpop.f32.mrf.mxu0
        %v605 = vadd.f32 0.0, %v604
        %v606 = vpop.f32.mrf.mxu0
        %607 = vmatprep.mubr.f32.mxu0 0.0
        %608 = vmatmul.mubr.f32.gmra.mxu0 %v480
        %v609 = vpop.f32.mrf.mxu0
        %v610 = vadd.f32 0.0, %v609
        %v611 = vpop.f32.mrf.mxu0
        %612 = vmatprep.mubr.f32.mxu0 0.0
        %613 = vmatmul.mubr.f32.gmra.mxu0 %v483
        %v614 = vpop.f32.mrf.mxu0
        %v615 = vadd.f32 0.0, %v614
        %v616 = vpop.f32.mrf.mxu0
        %617 = vmatprep.mubr.f32.mxu0 0.0
        %618 = vmatmul.mubr.f32.gmra.mxu0 %v486
        %v619 = vpop.f32.mrf.mxu0
        %v620 = vadd.f32 0.0, %v619
        %v621 = vpop.f32.mrf.mxu0
        %622 = vmatprep.mubr.f32.mxu0 0.0
        %623 = vmatmul.mubr.f32.gmra.mxu0 %v489
        %v624 = vpop.f32.mrf.mxu0
        %v625 = vadd.f32 0.0, %v624
        %v626 = vpop.f32.mrf.mxu0
        %627 = vmatprep.mubr.f32.mxu0 0.0
        %628 = vmatmul.mubr.f32.gmra.mxu0 %v492
        %v629 = vpop.f32.mrf.mxu0
        %v630 = vadd.f32 0.0, %v629
        %v631 = vpop.f32.mrf.mxu0
        %632 = vmatprep.mubr.f32.mxu0 0.0
        %633 = vmatmul.mubr.f32.gmra.mxu0 %v495
        %v634 = vpop.f32.mrf.mxu0
        %v635 = vadd.f32 0.0, %v634
        %v636 = vpop.f32.mrf.mxu0
        %637 = vmatprep.mubr.f32.mxu0 0.0
        %638 = vmatmul.mubr.f32.gmra.mxu0 %v498
        %v639 = vpop.f32.mrf.mxu0
        %v640 = vadd.f32 0.0, %v639
        %v641 = vpop.f32.mrf.mxu0
        %642 = vmatprep.mubr.f32.mxu0 0.0
        %643 = vmatmul.mubr.f32.gmra.mxu0 %v501
        %v644 = vpop.f32.mrf.mxu0
        %v645 = vadd.f32 0.0, %v644
        %v646 = vpop.f32.mrf.mxu0
        %647 = vdwg.mxu0
        %vm648 = vcmask 523264
        %649 = vst.msk [vmem:[%s218] sm:$0xff] %vm648, %v570
        %650 = vst.msk [vmem:[%s218 + $0x8] sm:$0xff] %vm648, %v575
        %651 = vst.msk [vmem:[%s218 + $0x10] sm:$0xff] %vm648, %v580
        %652 = vst.msk [vmem:[%s218 + $0x18] sm:$0xff] %vm648, %v585
        %653 = vst.msk [vmem:[%s218 + $0x20] sm:$0xff] %vm648, %v590
        %654 = vst.msk [vmem:[%s218 + $0x28] sm:$0xff] %vm648, %v595
        %655 = vst.msk [vmem:[%s218 + $0x30] sm:$0xff] %vm648, %v600
        %656 = vst.msk [vmem:[%s218 + $0x38] sm:$0xff] %vm648, %v605
        %657 = vst.msk [vmem:[%s218 + $0x40] sm:$0xff] %vm648, %v610
        %658 = vst.msk [vmem:[%s218 + $0x48] sm:$0xff] %vm648, %v615
        %659 = vst.msk [vmem:[%s218 + $0x50] sm:$0xff] %vm648, %v620
        %660 = vst.msk [vmem:[%s218 + $0x58] sm:$0xff] %vm648, %v625
        %661 = vst.msk [vmem:[%s218 + $0x60] sm:$0xff] %vm648, %v630
        %662 = vst.msk [vmem:[%s218 + $0x68] sm:$0xff] %vm648, %v635
        %663 = vst.msk [vmem:[%s218 + $0x70] sm:$0xff] %vm648, %v640
        %664 = vst.msk [vmem:[%s218 + $0x78] sm:$0xff] %vm648, %v645
        %s665 = sand.u32 %s97, 1
        %s666 = scalar_lea.sflag [#allocation4], %s665
        %s667 = sand.u32 %s97, 1
        %s668 = smul.addr %s667, 128
        %s669 = scalar_lea.vmem [#allocation8], %s668
        // Predicated region
        $region45: #{tpu_custom_call.1} parent=31 // pred_check
          %p670 = pneg %p107
        $region46: #{tpu_custom_call.1} parent=31 // pred_check_branch
          %672 = sbr.rel (%p670) target = $region48
        $region47: #{tpu_custom_call.1} parent=31 // pred_region
          %s673 = smul.u32 2, %s21
          %s675 = ssub.s32 2048, 2048
          %676 = vsyncadd %s666, %s675
          %s677 = smul.addr %s673, 8
          %s678 = smul.addr %s677, 128
          %s679 = scalar_lea.hbm %s3, %s678
          %s680 = sshll.u32 %s669, 4
          %s681 = int_to_ptr.vmem [resolvable:$true] %s680
          %686 = dma.vmem_to_hbm [thread:$0]  %s681, 2048, %s679, %s666, 128, 128, 8
        $region48: #{tpu_custom_call.1} parent=31 // pred_fallthru
          _
      $region32: #{tpu_custom_call.1} parent=5 // pred_fallthru
        _
      %p687 = scmp.le.s32.totalorder 2, %s16
      // Predicated region
      $region49: #{tpu_custom_call.1} parent=5 // pred_check
        %p688 = pneg %p687
      $region50: #{tpu_custom_call.1} parent=5 // pred_check_branch
        %690 = sbr.rel (%p688) target = $region52
      $region51: #{tpu_custom_call.1} parent=5 // pred_region
        %s691 = ssub.s32 %s16, 2
        // Predicated region
        $region53: #{tpu_custom_call.1} parent=51 // pred_check
          %p692 = pneg %p113
        $region54: #{tpu_custom_call.1} parent=51 // pred_check_branch
          %694 = sbr.rel (%p692) target = $region56
        $region55: #{tpu_custom_call.1} parent=51 // pred_region
          %s695 = sand.u32 %s98, 1
          %s696 = scalar_lea.sflag [#allocation4], %s695
          %s697 = sand.u32 %s98, 1
          %s698 = smul.addr %s697, 128
          %s699 = scalar_lea.vmem [#allocation8], %s698
          %700 = dma.done %s696, 2048
        $region56: #{tpu_custom_call.1} parent=51 // pred_fallthru
          _
      $region52: #{tpu_custom_call.1} parent=5 // pred_fallthru
        _
    $region6: #{tpu_custom_call.1} parent=1 // loop_footer
      %s20 = sadd.s32 1, %s16
    $region7: #{tpu_custom_call.1} parent=1 // loop_footer_branch
      %15 = sbr.rel target = $region3
    $region8: #{tpu_custom_call.1} parent=1 // loop_exit
      _
    %701 = vsyncpa [#allocation3], 1
    %s702 = scalar_lea.sflag [#allocation3], 1
    %703 = vsyncpa %s702, 1
    %704 = vsyncpa [#allocation6], 1
    %s705 = scalar_lea.sflag [#allocation6], 1
    %706 = vsyncpa %s705, 1
    %707 = vsyncpa [#allocation4], 1
    %s708 = scalar_lea.sflag [#allocation4], 1
    %709 = vsyncpa %s708, 1

</llo_original>
